<compile_context>
chip_gen: v7x
topology: tpu7x:2x2x1
jax: 0.10.0
libtpu: 0.0.40
codegen_flags: <defaults>
</compile_context>

<pallas_src>
import math
from functools import partial

import jax
import jax.numpy as jnp
from jax.experimental import pallas as pl
from jax.experimental.pallas import tpu as pltpu


def _encoder_block_kernel(x_ref, mask_ref,
                          wqkv_ref, wo_ref,
                          w1_ref, b1_ref, w2_ref, b2_ref,
                          ln1_a_ref, ln1_b_ref, ln2_a_ref, ln2_b_ref,
                          o_ref, *, num_heads, eps):
    """One batch element per grid step: full EncoderBlock forward in VMEM."""
    S, D = x_ref.shape[1], x_ref.shape[2]
    dk = D // num_heads
    scale = 1.0 / math.sqrt(dk)

    x = x_ref[0].astype(jnp.float32)          # (S, D)
    masked = mask_ref[0] == 0.0               # (S, S) bool — hoisted out of head loop

    def layer_norm(y, a_ref, b_ref):
        # Matches the PyTorch LayerNormalization: unbiased std (N-1), eps on std.
        mean = jnp.mean(y, axis=-1, keepdims=True)
        var = jnp.sum((y - mean) ** 2, axis=-1, keepdims=True) * (1.0 / (D - 1))
        std = jnp.sqrt(var)
        return a_ref[...] * (y - mean) / (std + eps) + b_ref[...]

    # ---------------- Residual connection 1: pre-norm + self-attention ------
    xn = layer_norm(x, ln1_a_ref, ln1_b_ref)
    # Fused Q/K/V projection: one MXU matmul instead of three.
    qkv = jnp.dot(xn, wqkv_ref[...], preferred_element_type=jnp.float32)  # (S, 3D)
    q = qkv[:, 0 * D:1 * D]
    k = qkv[:, 1 * D:2 * D]
    v = qkv[:, 2 * D:3 * D]

    # Per-head attention; output projection folded per-head into `ctx`
    # (avoids an in-kernel concatenate: concat(o_h) @ Wo == sum_h o_h @ Wo[h]).
    ctx = jnp.zeros((S, D), jnp.float32)
    for h in range(num_heads):
        lo, hi = h * dk, (h + 1) * dk
        qh, kh, vh = q[:, lo:hi], k[:, lo:hi], v[:, lo:hi]          # (S, dk)
        scores = jax.lax.dot_general(                                # q @ k^T
            qh, kh, (((1,), (1,)), ((), ())),
            preferred_element_type=jnp.float32) * scale              # (S, S)
        scores = jnp.where(masked, jnp.float32(-1e9), scores)
        m = jnp.max(scores, axis=-1, keepdims=True)
        e = jnp.exp(scores - m)
        p = e * pl.reciprocal(jnp.sum(e, axis=-1, keepdims=True), approx=True)
        # TODO(synk): attention/FFN dropout omitted — eval-mode forward
        # (nn.Dropout == identity); training-mode PRNG dropout not emitted.
        oh = jnp.dot(p, vh, preferred_element_type=jnp.float32)      # (S, dk)
        ctx = ctx + jnp.dot(oh, wo_ref[lo:hi, :],
                            preferred_element_type=jnp.float32)      # (S, D)

    x1 = x + ctx                                                     # residual 1

    # ---------------- Residual connection 2: pre-norm + feed-forward --------
    xn2 = layer_norm(x1, ln2_a_ref, ln2_b_ref)
    hdn = jnp.maximum(
        jnp.dot(xn2, w1_ref[...], preferred_element_type=jnp.float32)
        + b1_ref[...], 0.0)                                          # (S, d_ff)
    ffn = jnp.dot(hdn, w2_ref[...],
                  preferred_element_type=jnp.float32) + b2_ref[...]  # (S, D)

    o_ref[0] = (x1 + ffn).astype(o_ref.dtype)


def encoder_block_forward(x, mask, params, *, num_heads, eps=1e-6):
    """x: (B, S, D) f32, mask: (B, S, S) f32 (1=keep, 0=mask). Returns (B, S, D)."""
    B, S, D = x.shape
    (wq, wk, wv, wo, w1, b1, w2, b2, a1, bb1, a2, bb2) = params
    d_ff = w1.shape[1]

    # Fuse the three projection weights once, outside the kernel.
    wqkv = jnp.concatenate([wq, wk, wv], axis=1)                     # (D, 3D)

    kernel = partial(_encoder_block_kernel, num_heads=num_heads, eps=float(eps))

    in_specs = [
        pl.BlockSpec((1, S, D), lambda b: (b, 0, 0)),    # x   (per-batch block)
        pl.BlockSpec((1, S, S), lambda b: (b, 0, 0)),    # mask
        pl.BlockSpec((D, 3 * D), lambda b: (0, 0)),      # wqkv (resident)
        pl.BlockSpec((D, D), lambda b: (0, 0)),          # wo
        pl.BlockSpec((D, d_ff), lambda b: (0, 0)),       # w1
        pl.BlockSpec((1, d_ff), lambda b: (0, 0)),       # b1
        pl.BlockSpec((d_ff, D), lambda b: (0, 0)),       # w2
        pl.BlockSpec((1, D), lambda b: (0, 0)),          # b2
        pl.BlockSpec((1, D), lambda b: (0, 0)),          # ln1 alpha
        pl.BlockSpec((1, D), lambda b: (0, 0)),          # ln1 bias
        pl.BlockSpec((1, D), lambda b: (0, 0)),          # ln2 alpha
        pl.BlockSpec((1, D), lambda b: (0, 0)),          # ln2 bias
    ]
    out_specs = pl.BlockSpec((1, S, D), lambda b: (b, 0, 0))

    return pl.pallas_call(
        kernel,
        out_shape=jax.ShapeDtypeStruct((B, S, D), x.dtype),
        grid=(B,),
        in_specs=in_specs,
        out_specs=out_specs,
        compiler_params=pltpu.CompilerParams(
            dimension_semantics=("parallel",),      # batch shards across TCs (v7x)
            vmem_limit_bytes=32 * 1024 * 1024,      # ample headroom on v5e/v6e/v7x
        ),
    )(x, mask, wqkv, wo, w1, b1, w2, b2, a1, bb1, a2, bb2)


# ----------------------------- pure-JAX reference ---------------------------
def encoder_block_ref(x, mask, params, *, num_heads, eps=1e-6):
    (wq, wk, wv, wo, w1, b1, w2, b2, a1, bb1, a2, bb2) = params
    B, S, D = x.shape
    dk = D // num_heads

    def ln(y, a, b):
        mean = jnp.mean(y, axis=-1, keepdims=True)
        var = jnp.sum((y - mean) ** 2, axis=-1, keepdims=True) / (D - 1)
        std = jnp.sqrt(var)
        return a * (y - mean) / (std + eps) + b

    xn = ln(x, a1, bb1)
    q = xn @ wq
    k = xn @ wk
    v = xn @ wv
    qh = q.reshape(B, S, num_heads, dk).transpose(0, 2, 1, 3)
    kh = k.reshape(B, S, num_heads, dk).transpose(0, 2, 1, 3)
    vh = v.reshape(B, S, num_heads, dk).transpose(0, 2, 1, 3)
    scores = jnp.einsum('bhqd,bhkd->bhqk', qh, kh) / math.sqrt(dk)
    scores = jnp.where(mask[:, None, :, :] == 0.0, -1e9, scores)
    p = jax.nn.softmax(scores, axis=-1)
    o = jnp.einsum('bhqk,bhkd->bhqd', p, vh).transpose(0, 2, 1, 3).reshape(B, S, D)
    x1 = x + o @ wo
    xn2 = ln(x1, a2, bb2)
    hdn = jax.nn.relu(xn2 @ w1 + b1)
    return x1 + hdn @ w2 + b2


if __name__ == "__main__":
    # Small shapes consistent with the module.
    B, S, D, H, d_ff = 2, 8, 32, 4, 64
    eps = 1e-6

    key = jax.random.PRNGKey(0)
    ks = jax.random.split(key, 8)
    x = jax.random.normal(ks[0], (B, S, D), dtype=jnp.float32)

    sw = 1.0 / math.sqrt(D)
    # Weights stored as (in, out), i.e. already-transposed nn.Linear weights.
    wq = jax.random.normal(ks[1], (D, D), jnp.float32) * sw
    wk = jax.random.normal(ks[2], (D, D), jnp.float32) * sw
    wv = jax.random.normal(ks[3], (D, D), jnp.float32) * sw
    wo = jax.random.normal(ks[4], (D, D), jnp.float32) * sw
    w1 = jax.random.normal(ks[5], (D, d_ff), jnp.float32) * sw
    b1 = jax.random.normal(ks[6], (1, d_ff), jnp.float32) * 0.1
    w2 = jax.random.normal(ks[7], (d_ff, D), jnp.float32) * (1.0 / math.sqrt(d_ff))
    b2 = jnp.zeros((1, D), jnp.float32)
    # LayerNormalization.__init__: alpha = ones, bias = ones (per the spec).
    a1 = jnp.ones((1, D), jnp.float32)
    bb1 = jnp.ones((1, D), jnp.float32)
    a2 = jnp.ones((1, D), jnp.float32)
    bb2 = jnp.ones((1, D), jnp.float32)
    params = (wq, wk, wv, wo, w1, b1, w2, b2, a1, bb1, a2, bb2)

    # Mask: 1 = attend, 0 = masked.  Batch 1 cannot attend to the last 2 tokens.
    mask = jnp.ones((B, S, S), jnp.float32)
    mask = mask.at[1, :, 6:].set(0.0)

    out = encoder_block_forward(x, mask, params, num_heads=H, eps=eps)
    out = jax.block_until_ready(out)

    ref = encoder_block_ref(x, mask, params, num_heads=H, eps=eps)
    assert out.shape == (B, S, D)
    assert jnp.allclose(out, ref, atol=1e-2, rtol=1e-2), (
        f"mismatch vs reference, max abs err = {jnp.max(jnp.abs(out - ref))}")

    print("KERNEL_OK")
</pallas_src>

<mosaic_0001>
module attributes {stable_mosaic.version = 11 : i64} {
  func.func @_encoder_block_kernel(%arg0: i32, %arg1: memref<1x8x32xf32, #tpu.memory_space<vmem>>, %arg2: memref<1x8x8xf32, #tpu.memory_space<vmem>>, %arg3: memref<32x96xf32, #tpu.memory_space<vmem>>, %arg4: memref<32x32xf32, #tpu.memory_space<vmem>>, %arg5: memref<32x64xf32, #tpu.memory_space<vmem>>, %arg6: memref<1x64xf32, #tpu.memory_space<vmem>>, %arg7: memref<64x32xf32, #tpu.memory_space<vmem>>, %arg8: memref<1x32xf32, #tpu.memory_space<vmem>>, %arg9: memref<1x32xf32, #tpu.memory_space<vmem>>, %arg10: memref<1x32xf32, #tpu.memory_space<vmem>>, %arg11: memref<1x32xf32, #tpu.memory_space<vmem>>, %arg12: memref<1x32xf32, #tpu.memory_space<vmem>>, %arg13: memref<1x8x32xf32, #tpu.memory_space<vmem>>) attributes {dimension_semantics = [#tpu.dimension_semantics<parallel>], iteration_bounds = array<i64: 2>, scalar_prefetch = 0 : i64, scratch_operands = 0 : i64, tpu.core_type = #tpu.core_type<tc>, window_params = [{transform_indices = @transform_0, window_bounds = array<i64: 1, 8, 32>}, {transform_indices = @transform_1, window_bounds = array<i64: 1, 8, 8>}, {pipeline_mode = #tpu.pipeline_mode<synchronous>, transform_indices = @transform_2, window_bounds = array<i64: 32, 96>}, {pipeline_mode = #tpu.pipeline_mode<synchronous>, transform_indices = @transform_3, window_bounds = array<i64: 32, 32>}, {pipeline_mode = #tpu.pipeline_mode<synchronous>, transform_indices = @transform_4, window_bounds = array<i64: 32, 64>}, {pipeline_mode = #tpu.pipeline_mode<synchronous>, transform_indices = @transform_5, window_bounds = array<i64: 1, 64>}, {pipeline_mode = #tpu.pipeline_mode<synchronous>, transform_indices = @transform_6, window_bounds = array<i64: 64, 32>}, {pipeline_mode = #tpu.pipeline_mode<synchronous>, transform_indices = @transform_7, window_bounds = array<i64: 1, 32>}, {pipeline_mode = #tpu.pipeline_mode<synchronous>, transform_indices = @transform_8, window_bounds = array<i64: 1, 32>}, {pipeline_mode = #tpu.pipeline_mode<synchronous>, transform_indices = @transform_9, window_bounds = array<i64: 1, 32>}, {pipeline_mode = #tpu.pipeline_mode<synchronous>, transform_indices = @transform_10, window_bounds = array<i64: 1, 32>}, {pipeline_mode = #tpu.pipeline_mode<synchronous>, transform_indices = @transform_11, window_bounds = array<i64: 1, 32>}, {transform_indices = @transform_12, window_bounds = array<i64: 1, 8, 32>}]} {
    %c0 = arith.constant 0 : index
    %c0_0 = arith.constant 0 : index
    %c0_1 = arith.constant 0 : index
    %0 = vector.load %arg1[%c0, %c0_0, %c0_1] : memref<1x8x32xf32, #tpu.memory_space<vmem>>, vector<1x8x32xf32>
    %1 = vector.shape_cast %0 : vector<1x8x32xf32> to vector<8x32xf32>
    %c0_2 = arith.constant 0 : index
    %c0_3 = arith.constant 0 : index
    %c0_4 = arith.constant 0 : index
    %2 = vector.load %arg2[%c0_2, %c0_3, %c0_4] : memref<1x8x8xf32, #tpu.memory_space<vmem>>, vector<1x8x8xf32>
    %3 = vector.shape_cast %2 : vector<1x8x8xf32> to vector<8x8xf32>
    %cst = arith.constant 0.000000e+00 : f32
    %4 = vector.broadcast %cst : f32 to vector<8x8xf32>
    %5 = arith.cmpf oeq, %3, %4 : vector<8x8xf32>
    %cst_5 = arith.constant dense<0.000000e+00> : vector<8xf32>
    %6 = vector.multi_reduction <add>, %1, %cst_5 [1] : vector<8x32xf32> to vector<8xf32>
    %7 = vector.shape_cast %6 : vector<8xf32> to vector<8x1xf32>
    %cst_6 = arith.constant 3.200000e+01 : f32
    %8 = vector.broadcast %cst_6 : f32 to vector<8x1xf32>
    %9 = arith.divf %7, %8 : vector<8x1xf32>
    %10 = vector.broadcast %9 : vector<8x1xf32> to vector<8x32xf32>
    %11 = arith.subf %1, %10 : vector<8x32xf32>
    %12 = arith.mulf %11, %11 : vector<8x32xf32>
    %cst_7 = arith.constant dense<0.000000e+00> : vector<8xf32>
    %13 = vector.multi_reduction <add>, %12, %cst_7 [1] : vector<8x32xf32> to vector<8xf32>
    %14 = vector.shape_cast %13 : vector<8xf32> to vector<8x1xf32>
    %cst_8 = arith.constant 0.0322580636 : f32
    %15 = vector.broadcast %cst_8 : f32 to vector<8x1xf32>
    %16 = arith.mulf %14, %15 : vector<8x1xf32>
    %17 = math.sqrt %16 : vector<8x1xf32>
    %c0_9 = arith.constant 0 : index
    %c0_10 = arith.constant 0 : index
    %18 = vector.load %arg9[%c0_9, %c0_10] : memref<1x32xf32, #tpu.memory_space<vmem>>, vector<1x32xf32>
    %19 = vector.broadcast %9 : vector<8x1xf32> to vector<8x32xf32>
    %20 = arith.subf %1, %19 : vector<8x32xf32>
    %21 = vector.broadcast %18 : vector<1x32xf32> to vector<8x32xf32>
    %22 = arith.mulf %21, %20 : vector<8x32xf32>
    %cst_11 = arith.constant 9.99999997E-7 : f32
    %23 = vector.broadcast %cst_11 : f32 to vector<8x1xf32>
    %24 = arith.addf %17, %23 : vector<8x1xf32>
    %25 = vector.broadcast %24 : vector<8x1xf32> to vector<8x32xf32>
    %26 = arith.divf %22, %25 : vector<8x32xf32>
    %c0_12 = arith.constant 0 : index
    %c0_13 = arith.constant 0 : index
    %27 = vector.load %arg10[%c0_12, %c0_13] : memref<1x32xf32, #tpu.memory_space<vmem>>, vector<1x32xf32>
    %28 = vector.broadcast %27 : vector<1x32xf32> to vector<8x32xf32>
    %29 = arith.addf %26, %28 : vector<8x32xf32>
    %c0_14 = arith.constant 0 : index
    %c0_15 = arith.constant 0 : index
    %30 = vector.load %arg3[%c0_14, %c0_15] : memref<32x96xf32, #tpu.memory_space<vmem>>, vector<32x96xf32>
    %cst_16 = arith.constant dense<0.000000e+00> : vector<8x96xf32>
    %31 = tpu.matmul %29, %30, %cst_16 {dimension_numbers = #tpu.dot_dimension_numbers<[1], [0], [0], [1], [0, 0, 1, 1], [], []>} : vector<8x32xf32>, vector<32x96xf32>, vector<8x96xf32> -> vector<8x96xf32>
    %32 = vector.extract_strided_slice %31 {offsets = [0, 0], sizes = [8, 32], strides = [1, 1]} : vector<8x96xf32> to vector<8x32xf32>
    %33 = vector.extract_strided_slice %31 {offsets = [0, 32], sizes = [8, 32], strides = [1, 1]} : vector<8x96xf32> to vector<8x32xf32>
    %34 = vector.extract_strided_slice %31 {offsets = [0, 64], sizes = [8, 32], strides = [1, 1]} : vector<8x96xf32> to vector<8x32xf32>
    %cst_17 = arith.constant 0.000000e+00 : f32
    %35 = vector.broadcast %cst_17 : f32 to vector<8x32xf32>
    %36 = vector.extract_strided_slice %32 {offsets = [0, 0], sizes = [8, 8], strides = [1, 1]} : vector<8x32xf32> to vector<8x8xf32>
    %37 = vector.extract_strided_slice %33 {offsets = [0, 0], sizes = [8, 8], strides = [1, 1]} : vector<8x32xf32> to vector<8x8xf32>
    %38 = vector.extract_strided_slice %34 {offsets = [0, 0], sizes = [8, 8], strides = [1, 1]} : vector<8x32xf32> to vector<8x8xf32>
    %cst_18 = arith.constant dense<0.000000e+00> : vector<8x8xf32>
    %39 = tpu.matmul %36, %37, %cst_18 {dimension_numbers = #tpu.dot_dimension_numbers<[1], [1], [0], [0], [0, 0, 1, 0], [], []>} : vector<8x8xf32>, vector<8x8xf32>, vector<8x8xf32> -> vector<8x8xf32>
    %cst_19 = arith.constant 0.353553385 : f32
    %40 = vector.broadcast %cst_19 : f32 to vector<8x8xf32>
    %41 = arith.mulf %39, %40 : vector<8x8xf32>
    %cst_20 = arith.constant -1.000000e+09 : f32
    %42 = vector.broadcast %cst_20 : f32 to vector<8x8xf32>
    %43 = arith.select %5, %42, %41 : vector<8x8xi1>, vector<8x8xf32>
    %cst_21 = arith.constant dense<0xFF800000> : vector<8xf32>
    %44 = vector.multi_reduction <maximumf>, %43, %cst_21 [1] : vector<8x8xf32> to vector<8xf32>
    %45 = vector.shape_cast %44 : vector<8xf32> to vector<8x1xf32>
    %46 = vector.broadcast %45 : vector<8x1xf32> to vector<8x8xf32>
    %47 = arith.subf %43, %46 : vector<8x8xf32>
    %48 = math.exp %47 : vector<8x8xf32>
    %cst_22 = arith.constant dense<0.000000e+00> : vector<8xf32>
    %49 = vector.multi_reduction <add>, %48, %cst_22 [1] : vector<8x8xf32> to vector<8xf32>
    %50 = vector.shape_cast %49 : vector<8xf32> to vector<8x1xf32>
    %51 = tpu.reciprocal %50 {approx = true} : vector<8x1xf32> -> vector<8x1xf32>
    %52 = vector.broadcast %51 : vector<8x1xf32> to vector<8x8xf32>
    %53 = arith.mulf %48, %52 : vector<8x8xf32>
    %cst_23 = arith.constant dense<0.000000e+00> : vector<8x8xf32>
    %54 = tpu.matmul %53, %38, %cst_23 {dimension_numbers = #tpu.dot_dimension_numbers<[1], [0], [0], [1], [0, 0, 1, 1], [], []>} : vector<8x8xf32>, vector<8x8xf32>, vector<8x8xf32> -> vector<8x8xf32>
    %c0_24 = arith.constant 0 : index
    %c0_25 = arith.constant 0 : index
    %55 = vector.load %arg4[%c0_24, %c0_25] : memref<32x32xf32, #tpu.memory_space<vmem>>, vector<8x32xf32>
    %cst_26 = arith.constant dense<0.000000e+00> : vector<8x32xf32>
    %56 = tpu.matmul %54, %55, %cst_26 {dimension_numbers = #tpu.dot_dimension_numbers<[1], [0], [0], [1], [0, 0, 1, 1], [], []>} : vector<8x8xf32>, vector<8x32xf32>, vector<8x32xf32> -> vector<8x32xf32>
    %57 = arith.addf %35, %56 : vector<8x32xf32>
    %58 = vector.extract_strided_slice %32 {offsets = [0, 8], sizes = [8, 8], strides = [1, 1]} : vector<8x32xf32> to vector<8x8xf32>
    %59 = vector.extract_strided_slice %33 {offsets = [0, 8], sizes = [8, 8], strides = [1, 1]} : vector<8x32xf32> to vector<8x8xf32>
    %60 = vector.extract_strided_slice %34 {offsets = [0, 8], sizes = [8, 8], strides = [1, 1]} : vector<8x32xf32> to vector<8x8xf32>
    %cst_27 = arith.constant dense<0.000000e+00> : vector<8x8xf32>
    %61 = tpu.matmul %58, %59, %cst_27 {dimension_numbers = #tpu.dot_dimension_numbers<[1], [1], [0], [0], [0, 0, 1, 0], [], []>} : vector<8x8xf32>, vector<8x8xf32>, vector<8x8xf32> -> vector<8x8xf32>
    %cst_28 = arith.constant 0.353553385 : f32
    %62 = vector.broadcast %cst_28 : f32 to vector<8x8xf32>
    %63 = arith.mulf %61, %62 : vector<8x8xf32>
    %cst_29 = arith.constant -1.000000e+09 : f32
    %64 = vector.broadcast %cst_29 : f32 to vector<8x8xf32>
    %65 = arith.select %5, %64, %63 : vector<8x8xi1>, vector<8x8xf32>
    %cst_30 = arith.constant dense<0xFF800000> : vector<8xf32>
    %66 = vector.multi_reduction <maximumf>, %65, %cst_30 [1] : vector<8x8xf32> to vector<8xf32>
    %67 = vector.shape_cast %66 : vector<8xf32> to vector<8x1xf32>
    %68 = vector.broadcast %67 : vector<8x1xf32> to vector<8x8xf32>
    %69 = arith.subf %65, %68 : vector<8x8xf32>
    %70 = math.exp %69 : vector<8x8xf32>
    %cst_31 = arith.constant dense<0.000000e+00> : vector<8xf32>
    %71 = vector.multi_reduction <add>, %70, %cst_31 [1] : vector<8x8xf32> to vector<8xf32>
    %72 = vector.shape_cast %71 : vector<8xf32> to vector<8x1xf32>
    %73 = tpu.reciprocal %72 {approx = true} : vector<8x1xf32> -> vector<8x1xf32>
    %74 = vector.broadcast %73 : vector<8x1xf32> to vector<8x8xf32>
    %75 = arith.mulf %70, %74 : vector<8x8xf32>
    %cst_32 = arith.constant dense<0.000000e+00> : vector<8x8xf32>
    %76 = tpu.matmul %75, %60, %cst_32 {dimension_numbers = #tpu.dot_dimension_numbers<[1], [0], [0], [1], [0, 0, 1, 1], [], []>} : vector<8x8xf32>, vector<8x8xf32>, vector<8x8xf32> -> vector<8x8xf32>
    %c8 = arith.constant 8 : index
    %c0_33 = arith.constant 0 : index
    %77 = vector.load %arg4[%c8, %c0_33] : memref<32x32xf32, #tpu.memory_space<vmem>>, vector<8x32xf32>
    %cst_34 = arith.constant dense<0.000000e+00> : vector<8x32xf32>
    %78 = tpu.matmul %76, %77, %cst_34 {dimension_numbers = #tpu.dot_dimension_numbers<[1], [0], [0], [1], [0, 0, 1, 1], [], []>} : vector<8x8xf32>, vector<8x32xf32>, vector<8x32xf32> -> vector<8x32xf32>
    %79 = arith.addf %57, %78 : vector<8x32xf32>
    %80 = vector.extract_strided_slice %32 {offsets = [0, 16], sizes = [8, 8], strides = [1, 1]} : vector<8x32xf32> to vector<8x8xf32>
    %81 = vector.extract_strided_slice %33 {offsets = [0, 16], sizes = [8, 8], strides = [1, 1]} : vector<8x32xf32> to vector<8x8xf32>
    %82 = vector.extract_strided_slice %34 {offsets = [0, 16], sizes = [8, 8], strides = [1, 1]} : vector<8x32xf32> to vector<8x8xf32>
    %cst_35 = arith.constant dense<0.000000e+00> : vector<8x8xf32>
    %83 = tpu.matmul %80, %81, %cst_35 {dimension_numbers = #tpu.dot_dimension_numbers<[1], [1], [0], [0], [0, 0, 1, 0], [], []>} : vector<8x8xf32>, vector<8x8xf32>, vector<8x8xf32> -> vector<8x8xf32>
    %cst_36 = arith.constant 0.353553385 : f32
    %84 = vector.broadcast %cst_36 : f32 to vector<8x8xf32>
    %85 = arith.mulf %83, %84 : vector<8x8xf32>
    %cst_37 = arith.constant -1.000000e+09 : f32
    %86 = vector.broadcast %cst_37 : f32 to vector<8x8xf32>
    %87 = arith.select %5, %86, %85 : vector<8x8xi1>, vector<8x8xf32>
    %cst_38 = arith.constant dense<0xFF800000> : vector<8xf32>
    %88 = vector.multi_reduction <maximumf>, %87, %cst_38 [1] : vector<8x8xf32> to vector<8xf32>
    %89 = vector.shape_cast %88 : vector<8xf32> to vector<8x1xf32>
    %90 = vector.broadcast %89 : vector<8x1xf32> to vector<8x8xf32>
    %91 = arith.subf %87, %90 : vector<8x8xf32>
    %92 = math.exp %91 : vector<8x8xf32>
    %cst_39 = arith.constant dense<0.000000e+00> : vector<8xf32>
    %93 = vector.multi_reduction <add>, %92, %cst_39 [1] : vector<8x8xf32> to vector<8xf32>
    %94 = vector.shape_cast %93 : vector<8xf32> to vector<8x1xf32>
    %95 = tpu.reciprocal %94 {approx = true} : vector<8x1xf32> -> vector<8x1xf32>
    %96 = vector.broadcast %95 : vector<8x1xf32> to vector<8x8xf32>
    %97 = arith.mulf %92, %96 : vector<8x8xf32>
    %cst_40 = arith.constant dense<0.000000e+00> : vector<8x8xf32>
    %98 = tpu.matmul %97, %82, %cst_40 {dimension_numbers = #tpu.dot_dimension_numbers<[1], [0], [0], [1], [0, 0, 1, 1], [], []>} : vector<8x8xf32>, vector<8x8xf32>, vector<8x8xf32> -> vector<8x8xf32>
    %c16 = arith.constant 16 : index
    %c0_41 = arith.constant 0 : index
    %99 = vector.load %arg4[%c16, %c0_41] : memref<32x32xf32, #tpu.memory_space<vmem>>, vector<8x32xf32>
    %cst_42 = arith.constant dense<0.000000e+00> : vector<8x32xf32>
    %100 = tpu.matmul %98, %99, %cst_42 {dimension_numbers = #tpu.dot_dimension_numbers<[1], [0], [0], [1], [0, 0, 1, 1], [], []>} : vector<8x8xf32>, vector<8x32xf32>, vector<8x32xf32> -> vector<8x32xf32>
    %101 = arith.addf %79, %100 : vector<8x32xf32>
    %102 = vector.extract_strided_slice %32 {offsets = [0, 24], sizes = [8, 8], strides = [1, 1]} : vector<8x32xf32> to vector<8x8xf32>
    %103 = vector.extract_strided_slice %33 {offsets = [0, 24], sizes = [8, 8], strides = [1, 1]} : vector<8x32xf32> to vector<8x8xf32>
    %104 = vector.extract_strided_slice %34 {offsets = [0, 24], sizes = [8, 8], strides = [1, 1]} : vector<8x32xf32> to vector<8x8xf32>
    %cst_43 = arith.constant dense<0.000000e+00> : vector<8x8xf32>
    %105 = tpu.matmul %102, %103, %cst_43 {dimension_numbers = #tpu.dot_dimension_numbers<[1], [1], [0], [0], [0, 0, 1, 0], [], []>} : vector<8x8xf32>, vector<8x8xf32>, vector<8x8xf32> -> vector<8x8xf32>
    %cst_44 = arith.constant 0.353553385 : f32
    %106 = vector.broadcast %cst_44 : f32 to vector<8x8xf32>
    %107 = arith.mulf %105, %106 : vector<8x8xf32>
    %cst_45 = arith.constant -1.000000e+09 : f32
    %108 = vector.broadcast %cst_45 : f32 to vector<8x8xf32>
    %109 = arith.select %5, %108, %107 : vector<8x8xi1>, vector<8x8xf32>
    %cst_46 = arith.constant dense<0xFF800000> : vector<8xf32>
    %110 = vector.multi_reduction <maximumf>, %109, %cst_46 [1] : vector<8x8xf32> to vector<8xf32>
    %111 = vector.shape_cast %110 : vector<8xf32> to vector<8x1xf32>
    %112 = vector.broadcast %111 : vector<8x1xf32> to vector<8x8xf32>
    %113 = arith.subf %109, %112 : vector<8x8xf32>
    %114 = math.exp %113 : vector<8x8xf32>
    %cst_47 = arith.constant dense<0.000000e+00> : vector<8xf32>
    %115 = vector.multi_reduction <add>, %114, %cst_47 [1] : vector<8x8xf32> to vector<8xf32>
    %116 = vector.shape_cast %115 : vector<8xf32> to vector<8x1xf32>
    %117 = tpu.reciprocal %116 {approx = true} : vector<8x1xf32> -> vector<8x1xf32>
    %118 = vector.broadcast %117 : vector<8x1xf32> to vector<8x8xf32>
    %119 = arith.mulf %114, %118 : vector<8x8xf32>
    %cst_48 = arith.constant dense<0.000000e+00> : vector<8x8xf32>
    %120 = tpu.matmul %119, %104, %cst_48 {dimension_numbers = #tpu.dot_dimension_numbers<[1], [0], [0], [1], [0, 0, 1, 1], [], []>} : vector<8x8xf32>, vector<8x8xf32>, vector<8x8xf32> -> vector<8x8xf32>
    %c24 = arith.constant 24 : index
    %c0_49 = arith.constant 0 : index
    %121 = vector.load %arg4[%c24, %c0_49] : memref<32x32xf32, #tpu.memory_space<vmem>>, vector<8x32xf32>
    %cst_50 = arith.constant dense<0.000000e+00> : vector<8x32xf32>
    %122 = tpu.matmul %120, %121, %cst_50 {dimension_numbers = #tpu.dot_dimension_numbers<[1], [0], [0], [1], [0, 0, 1, 1], [], []>} : vector<8x8xf32>, vector<8x32xf32>, vector<8x32xf32> -> vector<8x32xf32>
    %123 = arith.addf %101, %122 : vector<8x32xf32>
    %124 = arith.addf %1, %123 : vector<8x32xf32>
    %cst_51 = arith.constant dense<0.000000e+00> : vector<8xf32>
    %125 = vector.multi_reduction <add>, %124, %cst_51 [1] : vector<8x32xf32> to vector<8xf32>
    %126 = vector.shape_cast %125 : vector<8xf32> to vector<8x1xf32>
    %cst_52 = arith.constant 3.200000e+01 : f32
    %127 = vector.broadcast %cst_52 : f32 to vector<8x1xf32>
    %128 = arith.divf %126, %127 : vector<8x1xf32>
    %129 = vector.broadcast %128 : vector<8x1xf32> to vector<8x32xf32>
    %130 = arith.subf %124, %129 : vector<8x32xf32>
    %131 = arith.mulf %130, %130 : vector<8x32xf32>
    %cst_53 = arith.constant dense<0.000000e+00> : vector<8xf32>
    %132 = vector.multi_reduction <add>, %131, %cst_53 [1] : vector<8x32xf32> to vector<8xf32>
    %133 = vector.shape_cast %132 : vector<8xf32> to vector<8x1xf32>
    %cst_54 = arith.constant 0.0322580636 : f32
    %134 = vector.broadcast %cst_54 : f32 to vector<8x1xf32>
    %135 = arith.mulf %133, %134 : vector<8x1xf32>
    %136 = math.sqrt %135 : vector<8x1xf32>
    %c0_55 = arith.constant 0 : index
    %c0_56 = arith.constant 0 : index
    %137 = vector.load %arg11[%c0_55, %c0_56] : memref<1x32xf32, #tpu.memory_space<vmem>>, vector<1x32xf32>
    %138 = vector.broadcast %128 : vector<8x1xf32> to vector<8x32xf32>
    %139 = arith.subf %124, %138 : vector<8x32xf32>
    %140 = vector.broadcast %137 : vector<1x32xf32> to vector<8x32xf32>
    %141 = arith.mulf %140, %139 : vector<8x32xf32>
    %cst_57 = arith.constant 9.99999997E-7 : f32
    %142 = vector.broadcast %cst_57 : f32 to vector<8x1xf32>
    %143 = arith.addf %136, %142 : vector<8x1xf32>
    %144 = vector.broadcast %143 : vector<8x1xf32> to vector<8x32xf32>
    %145 = arith.divf %141, %144 : vector<8x32xf32>
    %c0_58 = arith.constant 0 : index
    %c0_59 = arith.constant 0 : index
    %146 = vector.load %arg12[%c0_58, %c0_59] : memref<1x32xf32, #tpu.memory_space<vmem>>, vector<1x32xf32>
    %147 = vector.broadcast %146 : vector<1x32xf32> to vector<8x32xf32>
    %148 = arith.addf %145, %147 : vector<8x32xf32>
    %c0_60 = arith.constant 0 : index
    %c0_61 = arith.constant 0 : index
    %149 = vector.load %arg5[%c0_60, %c0_61] : memref<32x64xf32, #tpu.memory_space<vmem>>, vector<32x64xf32>
    %cst_62 = arith.constant dense<0.000000e+00> : vector<8x64xf32>
    %150 = tpu.matmul %148, %149, %cst_62 {dimension_numbers = #tpu.dot_dimension_numbers<[1], [0], [0], [1], [0, 0, 1, 1], [], []>} : vector<8x32xf32>, vector<32x64xf32>, vector<8x64xf32> -> vector<8x64xf32>
    %c0_63 = arith.constant 0 : index
    %c0_64 = arith.constant 0 : index
    %151 = vector.load %arg6[%c0_63, %c0_64] : memref<1x64xf32, #tpu.memory_space<vmem>>, vector<1x64xf32>
    %152 = vector.broadcast %151 : vector<1x64xf32> to vector<8x64xf32>
    %153 = arith.addf %150, %152 : vector<8x64xf32>
    %cst_65 = arith.constant 0.000000e+00 : f32
    %154 = vector.broadcast %cst_65 : f32 to vector<8x64xf32>
    %155 = arith.maximumf %153, %154 : vector<8x64xf32>
    %c0_66 = arith.constant 0 : index
    %c0_67 = arith.constant 0 : index
    %156 = vector.load %arg7[%c0_66, %c0_67] : memref<64x32xf32, #tpu.memory_space<vmem>>, vector<64x32xf32>
    %cst_68 = arith.constant dense<0.000000e+00> : vector<8x32xf32>
    %157 = tpu.matmul %155, %156, %cst_68 {dimension_numbers = #tpu.dot_dimension_numbers<[1], [0], [0], [1], [0, 0, 1, 1], [], []>} : vector<8x64xf32>, vector<64x32xf32>, vector<8x32xf32> -> vector<8x32xf32>
    %c0_69 = arith.constant 0 : index
    %c0_70 = arith.constant 0 : index
    %158 = vector.load %arg8[%c0_69, %c0_70] : memref<1x32xf32, #tpu.memory_space<vmem>>, vector<1x32xf32>
    %159 = vector.broadcast %158 : vector<1x32xf32> to vector<8x32xf32>
    %160 = arith.addf %157, %159 : vector<8x32xf32>
    %161 = arith.addf %124, %160 : vector<8x32xf32>
    %c0_71 = arith.constant 0 : index
    %c0_72 = arith.constant 0 : index
    %c0_73 = arith.constant 0 : index
    %162 = vector.load %arg13[%c0_71, %c0_72, %c0_73] : memref<1x8x32xf32, #tpu.memory_space<vmem>>, vector<1x8x32xf32>
    %163 = vector.shape_cast %162 : vector<1x8x32xf32> to vector<8x32xf32>
    %164 = vector.shape_cast %161 : vector<8x32xf32> to vector<1x8x32xf32>
    tpu.vector_store %arg13[%c0_71, %c0_72, %c0_73], %164 {strides = array<i32>} : memref<1x8x32xf32, #tpu.memory_space<vmem>>, vector<1x8x32xf32>,
    return
  }
  func.func @transform_0(%arg0: i32) -> (i32, i32, i32) {
    %c0_i32 = arith.constant 0 : i32
    %c0_i32_0 = arith.constant 0 : i32
    %c0_i32_1 = arith.constant 0 : i32
    return %arg0, %c0_i32, %c0_i32_0 : i32, i32, i32
  }
  func.func @transform_1(%arg0: i32) -> (i32, i32, i32) {
    %c0_i32 = arith.constant 0 : i32
    %c0_i32_0 = arith.constant 0 : i32
    %c0_i32_1 = arith.constant 0 : i32
    return %arg0, %c0_i32, %c0_i32_0 : i32, i32, i32
  }
  func.func @transform_2(%arg0: i32) -> (i32, i32) {
    %c0_i32 = arith.constant 0 : i32
    %c0_i32_0 = arith.constant 0 : i32
    %c0_i32_1 = arith.constant 0 : i32
    return %c0_i32, %c0_i32_0 : i32, i32
  }
  func.func @transform_3(%arg0: i32) -> (i32, i32) {
    %c0_i32 = arith.constant 0 : i32
    %c0_i32_0 = arith.constant 0 : i32
    %c0_i32_1 = arith.constant 0 : i32
    return %c0_i32, %c0_i32_0 : i32, i32
  }
  func.func @transform_4(%arg0: i32) -> (i32, i32) {
    %c0_i32 = arith.constant 0 : i32
    %c0_i32_0 = arith.constant 0 : i32
    %c0_i32_1 = arith.constant 0 : i32
    return %c0_i32, %c0_i32_0 : i32, i32
  }
  func.func @transform_5(%arg0: i32) -> (i32, i32) {
    %c0_i32 = arith.constant 0 : i32
    %c0_i32_0 = arith.constant 0 : i32
    %c0_i32_1 = arith.constant 0 : i32
    return %c0_i32, %c0_i32_0 : i32, i32
  }
  func.func @transform_6(%arg0: i32) -> (i32, i32) {
    %c0_i32 = arith.constant 0 : i32
    %c0_i32_0 = arith.constant 0 : i32
    %c0_i32_1 = arith.constant 0 : i32
    return %c0_i32, %c0_i32_0 : i32, i32
  }
  func.func @transform_7(%arg0: i32) -> (i32, i32) {
    %c0_i32 = arith.constant 0 : i32
    %c0_i32_0 = arith.constant 0 : i32
    %c0_i32_1 = arith.constant 0 : i32
    return %c0_i32, %c0_i32_0 : i32, i32
  }
  func.func @transform_8(%arg0: i32) -> (i32, i32) {
    %c0_i32 = arith.constant 0 : i32
    %c0_i32_0 = arith.constant 0 : i32
    %c0_i32_1 = arith.constant 0 : i32
    return %c0_i32, %c0_i32_0 : i32, i32
  }
  func.func @transform_9(%arg0: i32) -> (i32, i32) {
    %c0_i32 = arith.constant 0 : i32
    %c0_i32_0 = arith.constant 0 : i32
    %c0_i32_1 = arith.constant 0 : i32
    return %c0_i32, %c0_i32_0 : i32, i32
  }
  func.func @transform_10(%arg0: i32) -> (i32, i32) {
    %c0_i32 = arith.constant 0 : i32
    %c0_i32_0 = arith.constant 0 : i32
    %c0_i32_1 = arith.constant 0 : i32
    return %c0_i32, %c0_i32_0 : i32, i32
  }
  func.func @transform_11(%arg0: i32) -> (i32, i32) {
    %c0_i32 = arith.constant 0 : i32
    %c0_i32_0 = arith.constant 0 : i32
    %c0_i32_1 = arith.constant 0 : i32
    return %c0_i32, %c0_i32_0 : i32, i32
  }
  func.func @transform_12(%arg0: i32) -> (i32, i32, i32) {
    %c0_i32 = arith.constant 0 : i32
    %c0_i32_0 = arith.constant 0 : i32
    %c0_i32_1 = arith.constant 0 : i32
    return %arg0, %c0_i32, %c0_i32_0 : i32, i32, i32
  }
}

</mosaic_0001>

<llo_original>
// kernel: tpu_custom_call.1
$region0: #{tpu_custom_call.1}
  #allocation0 [shape = 'u32[]', space=smem, size = 0x4, offset = 0x4, fixed_abs, tag = 'smem constant byte address 0x4 - core index']
  #allocation1 [shape = 'u32[144,128]{1,0:T(1,128)}', space=vmem, size = 0x12000, scoped, tag = 'internal scratch']
  %s0 = inlined_call_operand.hbm [shape: f32[2,8,32], index: 0, kind: input, shape index: {}]
  %s1 = inlined_call_operand.hbm [shape: f32[2,8,8], index: 1, kind: input, shape index: {}]
  %s2 = inlined_call_operand.vmem [shape: f32[32,96], index: 2, kind: input, shape index: {}]
  %s3 = inlined_call_operand.vmem [shape: f32[32,32], index: 3, kind: input, shape index: {}]
  %s4 = inlined_call_operand.vmem [shape: f32[32,64], index: 4, kind: input, shape index: {}]
  %s5 = inlined_call_operand.vmem [shape: f32[1,64], index: 5, kind: input, shape index: {}]
  %s6 = inlined_call_operand.vmem [shape: f32[64,32], index: 6, kind: input, shape index: {}]
  %s7 = inlined_call_operand.vmem [shape: f32[1,32], index: 7, kind: input, shape index: {}]
  %s8 = inlined_call_operand.vmem [shape: f32[1,32], index: 8, kind: input, shape index: {}]
  %s9 = inlined_call_operand.vmem [shape: f32[1,32], index: 9, kind: input, shape index: {}]
  %s10 = inlined_call_operand.vmem [shape: f32[1,32], index: 10, kind: input, shape index: {}]
  %s11 = inlined_call_operand.vmem [shape: f32[1,32], index: 11, kind: input, shape index: {}]
  %s12 = inlined_call_operand.hbm [shape: f32[2,8,32], index: 12, kind: output, shape index: {}]
  %s13 = sld [smem:[#allocation0]]
  $region89: #{tpu_custom_call.1} parent=0
    _
  %s15 = ssub.s32 1, %s13
  %s16 = scalar_select 0, %s15, %s13
  $region1: #{tpu_custom_call.1} parent=0
    #allocation2 [shape = 'u8[8192]{0}', space=vmem, size = 0x2000, scoped, tag = 'input window, operand 0']
    #allocation3 [shape = 's32[2]{0}', space=sflag, size = 0x8, scoped, tag = 'scoped memory for tpu_custom_call.1']
    #allocation4 [shape = 's32[2]{0}', space=sflag, size = 0x8, scoped, tag = 'scoped memory for tpu_custom_call.1']
    #allocation5 [shape = 'u8[8192]{0}', space=vmem, size = 0x2000, scoped, tag = 'input window, operand 1']
    #allocation6 [shape = 's32[2]{0}', space=sflag, size = 0x8, scoped, tag = 'scoped memory for tpu_custom_call.1']
    #allocation7 [shape = 'u8[8192]{0}', space=vmem, size = 0x2000, scoped, tag = 'output window, operand 0']
    %17 = vsyncpa [#allocation3], 0
    %s18 = scalar_lea.sflag [#allocation3], 1
    %19 = vsyncpa %s18, 0
    %20 = vsyncpa [#allocation6], 0
    %s21 = scalar_lea.sflag [#allocation6], 1
    %22 = vsyncpa %s21, 0
    %23 = vsyncpa [#allocation4], 0
    %s24 = scalar_lea.sflag [#allocation4], 1
    %25 = vsyncpa %s24, 0
    loop: start=0, step=1, limit=4
    $region2: #{tpu_custom_call.1} parent=1 // loop_pre_header
      _
    $region3: #{tpu_custom_call.1} parent=1 // loop_header
      %s27 = sphi 0, %s31
      %p28 = scmp.ge.s32.totalorder %s27, 4
      %s37 = sphi 0, %s39
      %s40 = sphi 0, %s37
      %s41 = sphi 0, %s40
      %s57 = sphi 0, %s41
      %s63 = sphi 0, %s65
      %s66 = sphi 0, %s63
      %s67 = sphi 0, %s66
      %s83 = sphi 0, %s67
      %s87 = sphi 0, %s87
      %s89 = sphi 0, %s87
      %s90 = sphi 0, %s89
      %s104 = sphi 0, %s90
      %s108 = sphi 0, %s108
      %s110 = sphi 0, %s108
      %s111 = sphi 0, %s110
      %s125 = sphi 0, %s111
      %s129 = sphi 0, %s129
      %s131 = sphi 0, %s129
      %s132 = sphi 0, %s131
      %s146 = sphi 0, %s132
      %s150 = sphi 0, %s150
      %s152 = sphi 0, %s150
      %s153 = sphi 0, %s152
      %s167 = sphi 0, %s153
      %s171 = sphi 0, %s171
      %s173 = sphi 0, %s171
      %s174 = sphi 0, %s173
      %s188 = sphi 0, %s174
      %s192 = sphi 0, %s192
      %s194 = sphi 0, %s192
      %s195 = sphi 0, %s194
      %s209 = sphi 0, %s195
      %s213 = sphi 0, %s213
      %s215 = sphi 0, %s213
      %s216 = sphi 0, %s215
      %s230 = sphi 0, %s216
      %s234 = sphi 0, %s234
      %s236 = sphi 0, %s234
      %s237 = sphi 0, %s236
      %s251 = sphi 0, %s237
      %s255 = sphi 0, %s255
      %s257 = sphi 0, %s255
      %s258 = sphi 0, %s257
      %s272 = sphi 0, %s258
      %s276 = sphi 0, %s276
      %s278 = sphi 0, %s276
      %s279 = sphi 0, %s278
      %s293 = sphi 0, %s279
      %s299 = sphi 0, %s301
      %s302 = sphi 0, %s299
      %s303 = sphi 0, %s302
      %s319 = sphi 0, %s303
    $region4: #{tpu_custom_call.1} parent=1 // loop_header_branch
      %30 = sbr.rel (%p28) target = $region8
    $region5: #{tpu_custom_call.1} parent=1 // loop_body
      %s32 = ssub.s32 %s27, 1
      %s33 = ssub.s32 %s27, 2
      %s34 = sadd.s32 %s27, 1
      %s35 = ssub.s32 %s27, %s34
      %p36 = scmp.eq.s32.totalorder %s35, 0
      %s38 = sadd.s32 %s37, 1
      %s39 = scalar_select %p36, %s37, %s38
      %p42 = pneg %p36
      %p43 = scmp.eq.s32.totalorder %s27, 1
      %p44 = por %p42, %p43
      %p45 = scmp.ne.s32.totalorder %s37, %s40
      %p46 = scmp.eq.s32.totalorder %s27, 0
      %p47 = por %p45, %p46
      %p48 = scmp.ne.s32.totalorder %s37, %s40
      %p49 = scmp.eq.s32.totalorder %s32, 1
      %p50 = por %p48, %p49
      %p51 = scmp.ne.s32.totalorder %s40, %s41
      %p52 = scmp.eq.s32.totalorder %s32, 0
      %p53 = por %p51, %p52
      %p54 = scmp.ne.s32.totalorder %s40, %s41
      %p55 = scmp.eq.s32.totalorder %s33, 1
      %p56 = por %p54, %p55
      %p58 = scmp.ne.s32.totalorder %s41, %s57
      %p59 = scmp.eq.s32.totalorder %s33, 0
      %p60 = por %p58, %p59
      %s61 = ssub.s32 %s27, %s34
      %p62 = scmp.eq.s32.totalorder %s61, 0
      %s64 = sadd.s32 %s63, 1
      %s65 = scalar_select %p62, %s63, %s64
      %p68 = pneg %p62
      %p69 = scmp.eq.s32.totalorder %s27, 1
      %p70 = por %p68, %p69
      %p71 = scmp.ne.s32.totalorder %s63, %s66
      %p72 = scmp.eq.s32.totalorder %s27, 0
      %p73 = por %p71, %p72
      %p74 = scmp.ne.s32.totalorder %s63, %s66
      %p75 = scmp.eq.s32.totalorder %s32, 1
      %p76 = por %p74, %p75
      %p77 = scmp.ne.s32.totalorder %s66, %s67
      %p78 = scmp.eq.s32.totalorder %s32, 0
      %p79 = por %p77, %p78
      %p80 = scmp.ne.s32.totalorder %s66, %s67
      %p81 = scmp.eq.s32.totalorder %s33, 1
      %p82 = por %p80, %p81
      %p84 = scmp.ne.s32.totalorder %s67, %s83
      %p85 = scmp.eq.s32.totalorder %s33, 0
      %p86 = por %p84, %p85
      %s88 = sadd.s32 %s87, 1
      %p91 = scmp.eq.s32.totalorder %s27, 1
      %p92 = scmp.ne.s32.totalorder %s87, %s89
      %p93 = scmp.eq.s32.totalorder %s27, 0
      %p94 = por %p92, %p93
      %p95 = scmp.ne.s32.totalorder %s87, %s89
      %p96 = scmp.eq.s32.totalorder %s32, 1
      %p97 = por %p95, %p96
      %p98 = scmp.ne.s32.totalorder %s89, %s90
      %p99 = scmp.eq.s32.totalorder %s32, 0
      %p100 = por %p98, %p99
      %p101 = scmp.ne.s32.totalorder %s89, %s90
      %p102 = scmp.eq.s32.totalorder %s33, 1
      %p103 = por %p101, %p102
      %p105 = scmp.ne.s32.totalorder %s90, %s104
      %p106 = scmp.eq.s32.totalorder %s33, 0
      %p107 = por %p105, %p106
      %s109 = sadd.s32 %s108, 1
      %p112 = scmp.eq.s32.totalorder %s27, 1
      %p113 = scmp.ne.s32.totalorder %s108, %s110
      %p114 = scmp.eq.s32.totalorder %s27, 0
      %p115 = por %p113, %p114
      %p116 = scmp.ne.s32.totalorder %s108, %s110
      %p117 = scmp.eq.s32.totalorder %s32, 1
      %p118 = por %p116, %p117
      %p119 = scmp.ne.s32.totalorder %s110, %s111
      %p120 = scmp.eq.s32.totalorder %s32, 0
      %p121 = por %p119, %p120
      %p122 = scmp.ne.s32.totalorder %s110, %s111
      %p123 = scmp.eq.s32.totalorder %s33, 1
      %p124 = por %p122, %p123
      %p126 = scmp.ne.s32.totalorder %s111, %s125
      %p127 = scmp.eq.s32.totalorder %s33, 0
      %p128 = por %p126, %p127
      %s130 = sadd.s32 %s129, 1
      %p133 = scmp.eq.s32.totalorder %s27, 1
      %p134 = scmp.ne.s32.totalorder %s129, %s131
      %p135 = scmp.eq.s32.totalorder %s27, 0
      %p136 = por %p134, %p135
      %p137 = scmp.ne.s32.totalorder %s129, %s131
      %p138 = scmp.eq.s32.totalorder %s32, 1
      %p139 = por %p137, %p138
      %p140 = scmp.ne.s32.totalorder %s131, %s132
      %p141 = scmp.eq.s32.totalorder %s32, 0
      %p142 = por %p140, %p141
      %p143 = scmp.ne.s32.totalorder %s131, %s132
      %p144 = scmp.eq.s32.totalorder %s33, 1
      %p145 = por %p143, %p144
      %p147 = scmp.ne.s32.totalorder %s132, %s146
      %p148 = scmp.eq.s32.totalorder %s33, 0
      %p149 = por %p147, %p148
      %s151 = sadd.s32 %s150, 1
      %p154 = scmp.eq.s32.totalorder %s27, 1
      %p155 = scmp.ne.s32.totalorder %s150, %s152
      %p156 = scmp.eq.s32.totalorder %s27, 0
      %p157 = por %p155, %p156
      %p158 = scmp.ne.s32.totalorder %s150, %s152
      %p159 = scmp.eq.s32.totalorder %s32, 1
      %p160 = por %p158, %p159
      %p161 = scmp.ne.s32.totalorder %s152, %s153
      %p162 = scmp.eq.s32.totalorder %s32, 0
      %p163 = por %p161, %p162
      %p164 = scmp.ne.s32.totalorder %s152, %s153
      %p165 = scmp.eq.s32.totalorder %s33, 1
      %p166 = por %p164, %p165
      %p168 = scmp.ne.s32.totalorder %s153, %s167
      %p169 = scmp.eq.s32.totalorder %s33, 0
      %p170 = por %p168, %p169
      %s172 = sadd.s32 %s171, 1
      %p175 = scmp.eq.s32.totalorder %s27, 1
      %p176 = scmp.ne.s32.totalorder %s171, %s173
      %p177 = scmp.eq.s32.totalorder %s27, 0
      %p178 = por %p176, %p177
      %p179 = scmp.ne.s32.totalorder %s171, %s173
      %p180 = scmp.eq.s32.totalorder %s32, 1
      %p181 = por %p179, %p180
      %p182 = scmp.ne.s32.totalorder %s173, %s174
      %p183 = scmp.eq.s32.totalorder %s32, 0
      %p184 = por %p182, %p183
      %p185 = scmp.ne.s32.totalorder %s173, %s174
      %p186 = scmp.eq.s32.totalorder %s33, 1
      %p187 = por %p185, %p186
      %p189 = scmp.ne.s32.totalorder %s174, %s188
      %p190 = scmp.eq.s32.totalorder %s33, 0
      %p191 = por %p189, %p190
      %s193 = sadd.s32 %s192, 1
      %p196 = scmp.eq.s32.totalorder %s27, 1
      %p197 = scmp.ne.s32.totalorder %s192, %s194
      %p198 = scmp.eq.s32.totalorder %s27, 0
      %p199 = por %p197, %p198
      %p200 = scmp.ne.s32.totalorder %s192, %s194
      %p201 = scmp.eq.s32.totalorder %s32, 1
      %p202 = por %p200, %p201
      %p203 = scmp.ne.s32.totalorder %s194, %s195
      %p204 = scmp.eq.s32.totalorder %s32, 0
      %p205 = por %p203, %p204
      %p206 = scmp.ne.s32.totalorder %s194, %s195
      %p207 = scmp.eq.s32.totalorder %s33, 1
      %p208 = por %p206, %p207
      %p210 = scmp.ne.s32.totalorder %s195, %s209
      %p211 = scmp.eq.s32.totalorder %s33, 0
      %p212 = por %p210, %p211
      %s214 = sadd.s32 %s213, 1
      %p217 = scmp.eq.s32.totalorder %s27, 1
      %p218 = scmp.ne.s32.totalorder %s213, %s215
      %p219 = scmp.eq.s32.totalorder %s27, 0
      %p220 = por %p218, %p219
      %p221 = scmp.ne.s32.totalorder %s213, %s215
      %p222 = scmp.eq.s32.totalorder %s32, 1
      %p223 = por %p221, %p222
      %p224 = scmp.ne.s32.totalorder %s215, %s216
      %p225 = scmp.eq.s32.totalorder %s32, 0
      %p226 = por %p224, %p225
      %p227 = scmp.ne.s32.totalorder %s215, %s216
      %p228 = scmp.eq.s32.totalorder %s33, 1
      %p229 = por %p227, %p228
      %p231 = scmp.ne.s32.totalorder %s216, %s230
      %p232 = scmp.eq.s32.totalorder %s33, 0
      %p233 = por %p231, %p232
      %s235 = sadd.s32 %s234, 1
      %p238 = scmp.eq.s32.totalorder %s27, 1
      %p239 = scmp.ne.s32.totalorder %s234, %s236
      %p240 = scmp.eq.s32.totalorder %s27, 0
      %p241 = por %p239, %p240
      %p242 = scmp.ne.s32.totalorder %s234, %s236
      %p243 = scmp.eq.s32.totalorder %s32, 1
      %p244 = por %p242, %p243
      %p245 = scmp.ne.s32.totalorder %s236, %s237
      %p246 = scmp.eq.s32.totalorder %s32, 0
      %p247 = por %p245, %p246
      %p248 = scmp.ne.s32.totalorder %s236, %s237
      %p249 = scmp.eq.s32.totalorder %s33, 1
      %p250 = por %p248, %p249
      %p252 = scmp.ne.s32.totalorder %s237, %s251
      %p253 = scmp.eq.s32.totalorder %s33, 0
      %p254 = por %p252, %p253
      %s256 = sadd.s32 %s255, 1
      %p259 = scmp.eq.s32.totalorder %s27, 1
      %p260 = scmp.ne.s32.totalorder %s255, %s257
      %p261 = scmp.eq.s32.totalorder %s27, 0
      %p262 = por %p260, %p261
      %p263 = scmp.ne.s32.totalorder %s255, %s257
      %p264 = scmp.eq.s32.totalorder %s32, 1
      %p265 = por %p263, %p264
      %p266 = scmp.ne.s32.totalorder %s257, %s258
      %p267 = scmp.eq.s32.totalorder %s32, 0
      %p268 = por %p266, %p267
      %p269 = scmp.ne.s32.totalorder %s257, %s258
      %p270 = scmp.eq.s32.totalorder %s33, 1
      %p271 = por %p269, %p270
      %p273 = scmp.ne.s32.totalorder %s258, %s272
      %p274 = scmp.eq.s32.totalorder %s33, 0
      %p275 = por %p273, %p274
      %s277 = sadd.s32 %s276, 1
      %p280 = scmp.eq.s32.totalorder %s27, 1
      %p281 = scmp.ne.s32.totalorder %s276, %s278
      %p282 = scmp.eq.s32.totalorder %s27, 0
      %p283 = por %p281, %p282
      %p284 = scmp.ne.s32.totalorder %s276, %s278
      %p285 = scmp.eq.s32.totalorder %s32, 1
      %p286 = por %p284, %p285
      %p287 = scmp.ne.s32.totalorder %s278, %s279
      %p288 = scmp.eq.s32.totalorder %s32, 0
      %p289 = por %p287, %p288
      %p290 = scmp.ne.s32.totalorder %s278, %s279
      %p291 = scmp.eq.s32.totalorder %s33, 1
      %p292 = por %p290, %p291
      %p294 = scmp.ne.s32.totalorder %s279, %s293
      %p295 = scmp.eq.s32.totalorder %s33, 0
      %p296 = por %p294, %p295
      %s297 = ssub.s32 %s27, %s34
      %p298 = scmp.eq.s32.totalorder %s297, 0
      %s300 = sadd.s32 %s299, 1
      %s301 = scalar_select %p298, %s299, %s300
      %p304 = pneg %p298
      %p305 = scmp.eq.s32.totalorder %s27, 1
      %p306 = por %p304, %p305
      %p307 = scmp.ne.s32.totalorder %s299, %s302
      %p308 = scmp.eq.s32.totalorder %s27, 0
      %p309 = por %p307, %p308
      %p310 = scmp.ne.s32.totalorder %s299, %s302
      %p311 = scmp.eq.s32.totalorder %s32, 1
      %p312 = por %p310, %p311
      %p313 = scmp.ne.s32.totalorder %s302, %s303
      %p314 = scmp.eq.s32.totalorder %s32, 0
      %p315 = por %p313, %p314
      %p316 = scmp.ne.s32.totalorder %s302, %s303
      %p317 = scmp.eq.s32.totalorder %s33, 1
      %p318 = por %p316, %p317
      %p320 = scmp.ne.s32.totalorder %s303, %s319
      %p321 = scmp.eq.s32.totalorder %s33, 0
      %p322 = por %p320, %p321
      %p323 = scmp.le.s32.totalorder 1, %s27
      %p324 = scmp.lt.s32.totalorder %s27, 3
      %p325 = pnand %p323, %p324
      %p326 = pneg %p325
      // Predicated region
      $region9: #{tpu_custom_call.1} parent=5 // pred_check
        _
      $region10: #{tpu_custom_call.1} parent=5 // pred_check_branch
        %328 = sbr.rel (%p325) target = $region12
      $region11: #{tpu_custom_call.1} parent=5 // pred_region
        %s329 = ssub.s32 %s27, 1
        // Predicated region
        $region13: #{tpu_custom_call.1} parent=11 // pred_check
          %p330 = pneg %p100
        $region14: #{tpu_custom_call.1} parent=11 // pred_check_branch
          %332 = sbr.rel (%p330) target = $region16
        $region15: #{tpu_custom_call.1} parent=11 // pred_region
          _
        $region16: #{tpu_custom_call.1} parent=11 // pred_fallthru
          _
        // Predicated region
        $region17: #{tpu_custom_call.1} parent=11 // pred_check
          %p333 = pneg %p121
        $region18: #{tpu_custom_call.1} parent=11 // pred_check_branch
          %335 = sbr.rel (%p333) target = $region20
        $region19: #{tpu_custom_call.1} parent=11 // pred_region
          _
        $region20: #{tpu_custom_call.1} parent=11 // pred_fallthru
          _
        // Predicated region
        $region21: #{tpu_custom_call.1} parent=11 // pred_check
          %p336 = pneg %p142
        $region22: #{tpu_custom_call.1} parent=11 // pred_check_branch
          %338 = sbr.rel (%p336) target = $region24
        $region23: #{tpu_custom_call.1} parent=11 // pred_region
          _
        $region24: #{tpu_custom_call.1} parent=11 // pred_fallthru
          _
        // Predicated region
        $region25: #{tpu_custom_call.1} parent=11 // pred_check
          %p339 = pneg %p163
        $region26: #{tpu_custom_call.1} parent=11 // pred_check_branch
          %341 = sbr.rel (%p339) target = $region28
        $region27: #{tpu_custom_call.1} parent=11 // pred_region
          _
        $region28: #{tpu_custom_call.1} parent=11 // pred_fallthru
          _
        // Predicated region
        $region29: #{tpu_custom_call.1} parent=11 // pred_check
          %p342 = pneg %p184
        $region30: #{tpu_custom_call.1} parent=11 // pred_check_branch
          %344 = sbr.rel (%p342) target = $region32
        $region31: #{tpu_custom_call.1} parent=11 // pred_region
          _
        $region32: #{tpu_custom_call.1} parent=11 // pred_fallthru
          _
        // Predicated region
        $region33: #{tpu_custom_call.1} parent=11 // pred_check
          %p345 = pneg %p205
        $region34: #{tpu_custom_call.1} parent=11 // pred_check_branch
          %347 = sbr.rel (%p345) target = $region36
        $region35: #{tpu_custom_call.1} parent=11 // pred_region
          _
        $region36: #{tpu_custom_call.1} parent=11 // pred_fallthru
          _
        // Predicated region
        $region37: #{tpu_custom_call.1} parent=11 // pred_check
          %p348 = pneg %p226
        $region38: #{tpu_custom_call.1} parent=11 // pred_check_branch
          %350 = sbr.rel (%p348) target = $region40
        $region39: #{tpu_custom_call.1} parent=11 // pred_region
          _
        $region40: #{tpu_custom_call.1} parent=11 // pred_fallthru
          _
        // Predicated region
        $region41: #{tpu_custom_call.1} parent=11 // pred_check
          %p351 = pneg %p247
        $region42: #{tpu_custom_call.1} parent=11 // pred_check_branch
          %353 = sbr.rel (%p351) target = $region44
        $region43: #{tpu_custom_call.1} parent=11 // pred_region
          _
        $region44: #{tpu_custom_call.1} parent=11 // pred_fallthru
          _
        // Predicated region
        $region45: #{tpu_custom_call.1} parent=11 // pred_check
          %p354 = pneg %p268
        $region46: #{tpu_custom_call.1} parent=11 // pred_check_branch
          %356 = sbr.rel (%p354) target = $region48
        $region47: #{tpu_custom_call.1} parent=11 // pred_region
          _
        $region48: #{tpu_custom_call.1} parent=11 // pred_fallthru
          _
        // Predicated region
        $region49: #{tpu_custom_call.1} parent=11 // pred_check
          %p357 = pneg %p289
        $region50: #{tpu_custom_call.1} parent=11 // pred_check_branch
          %359 = sbr.rel (%p357) target = $region52
        $region51: #{tpu_custom_call.1} parent=11 // pred_region
          _
        $region52: #{tpu_custom_call.1} parent=11 // pred_fallthru
          _
      $region12: #{tpu_custom_call.1} parent=5 // pred_fallthru
        _
      %p360 = scmp.lt.s32.totalorder %s27, 2
      // Predicated region
      $region53: #{tpu_custom_call.1} parent=5 // pred_check
        %p361 = pneg %p360
      $region54: #{tpu_custom_call.1} parent=5 // pred_check_branch
        %363 = sbr.rel (%p361) target = $region56
      $region55: #{tpu_custom_call.1} parent=5 // pred_region
        // Predicated region
        $region57: #{tpu_custom_call.1} parent=55 // pred_check
          %p364 = pneg %p47
        $region58: #{tpu_custom_call.1} parent=55 // pred_check_branch
          %366 = sbr.rel (%p364) target = $region60
        $region59: #{tpu_custom_call.1} parent=55 // pred_region
          %s367 = sand.u32 %s37, 1
          %s368 = scalar_lea.sflag [#allocation3], %s367
          %s369 = sand.u32 %s37, 1
          %s370 = smul.addr %s369, 8
          %s371 = scalar_lea.vmem [#allocation2], %s370
          %s373 = ssub.s32 128, 128
          %374 = vsyncadd %s368, %s373
          %s375 = smul.addr %s27, 128
          %s376 = scalar_lea.hbm %s0, %s375
          %s378 = sshll.u32 %s371, 4
          %s379 = int_to_ptr.vmem [resolvable:$true] %s378
          %381 = dma.hbm_to_vmem [thread:$0]  %s376, 128, %s379, %s368
        $region60: #{tpu_custom_call.1} parent=55 // pred_fallthru
          _
        // Predicated region
        $region61: #{tpu_custom_call.1} parent=55 // pred_check
          %p382 = pneg %p73
        $region62: #{tpu_custom_call.1} parent=55 // pred_check_branch
          %384 = sbr.rel (%p382) target = $region64
        $region63: #{tpu_custom_call.1} parent=55 // pred_region
          %s385 = sand.u32 %s63, 1
          %s386 = scalar_lea.sflag [#allocation6], %s385
          %s387 = sand.u32 %s63, 1
          %s388 = smul.addr %s387, 8
          %s389 = scalar_lea.vmem [#allocation5], %s388
          %s391 = ssub.s32 128, 128
          %392 = vsyncadd %s386, %s391
          %s393 = smul.addr %s27, 128
          %s394 = scalar_lea.hbm %s1, %s393
          %s396 = sshll.u32 %s389, 4
          %s397 = int_to_ptr.vmem [resolvable:$true] %s396
          %399 = dma.hbm_to_vmem [thread:$0]  %s394, 128, %s397, %s386
        $region64: #{tpu_custom_call.1} parent=55 // pred_fallthru
          _
      $region56: #{tpu_custom_call.1} parent=5 // pred_fallthru
        _
      %p400 = scmp.le.s32.totalorder 1, %s27
      %p401 = scmp.lt.s32.totalorder %s27, 3
      %p402 = pnand %p400, %p401
      %p403 = pneg %p402
      // Predicated region
      $region65: #{tpu_custom_call.1} parent=5 // pred_check
        _
      $region66: #{tpu_custom_call.1} parent=5 // pred_check_branch
        %405 = sbr.rel (%p402) target = $region68
      $region67: #{tpu_custom_call.1} parent=5 // pred_region
        %s406 = ssub.s32 %s27, 1
        %s407 = sand.u32 %s40, 1
        %s408 = scalar_lea.sflag [#allocation3], %s407
        %s409 = sand.u32 %s40, 1
        %s410 = smul.addr %s409, 8
        %s411 = scalar_lea.vmem [#allocation2], %s410
        // Predicated region
        $region69: #{tpu_custom_call.1} parent=67 // pred_check
          %p412 = pneg %p53
        $region70: #{tpu_custom_call.1} parent=67 // pred_check_branch
          %414 = sbr.rel (%p412) target = $region72
        $region71: #{tpu_custom_call.1} parent=67 // pred_region
          %415 = dma.done %s408, 128
        $region72: #{tpu_custom_call.1} parent=67 // pred_fallthru
          _
        %s416 = sand.u32 %s66, 1
        %s417 = scalar_lea.sflag [#allocation6], %s416
        %s418 = sand.u32 %s66, 1
        %s419 = smul.addr %s418, 8
        %s420 = scalar_lea.vmem [#allocation5], %s419
        // Predicated region
        $region73: #{tpu_custom_call.1} parent=67 // pred_check
          %p421 = pneg %p79
        $region74: #{tpu_custom_call.1} parent=67 // pred_check_branch
          %423 = sbr.rel (%p421) target = $region76
        $region75: #{tpu_custom_call.1} parent=67 // pred_region
          %424 = dma.done %s417, 128
        $region76: #{tpu_custom_call.1} parent=67 // pred_fallthru
          _
        %s425 = sand.u32 %s40, 1
        %s426 = scalar_lea.sflag [#allocation3], %s425
        %s427 = sand.u32 %s40, 1
        %s428 = smul.addr %s427, 8
        %s429 = scalar_lea.vmem [#allocation2], %s428
        %p430 = pneg %p53
        %p431 = pneg %p50
        %s432 = sand.u32 %s66, 1
        %s433 = scalar_lea.sflag [#allocation6], %s432
        %s434 = sand.u32 %s66, 1
        %s435 = smul.addr %s434, 8
        %s436 = scalar_lea.vmem [#allocation5], %s435
        %p437 = pneg %p79
        %p438 = pneg %p76
        %p439 = pneg %p100
        %p440 = pneg %p97
        %p441 = pneg %p121
        %p442 = pneg %p118
        %p443 = pneg %p142
        %p444 = pneg %p139
        %p445 = pneg %p163
        %p446 = pneg %p160
        %p447 = pneg %p184
        %p448 = pneg %p181
        %p449 = pneg %p205
        %p450 = pneg %p202
        %p451 = pneg %p226
        %p452 = pneg %p223
        %p453 = pneg %p247
        %p454 = pneg %p244
        %p455 = pneg %p268
        %p456 = pneg %p265
        %p457 = pneg %p289
        %p458 = pneg %p286
        %p459 = pneg %p315
        %p460 = pneg %p312
        %s461 = sand.u32 %s302, 1
        %s462 = scalar_lea.sflag [#allocation4], %s461
        %s463 = sand.u32 %s302, 1
        %s464 = smul.addr %s463, 8
        %s465 = scalar_lea.vmem [#allocation7], %s464
        %v466 = vld [vmem:[%s411] sm:$0xff]
        %v467 = vld [vmem:[%s420] sm:$0xff]
        %vm468 = vcmp.eq.f32.partialorder %v467, 0.0
        %vm469 = vcmask 261120
        %v470 = vsel %vm469, %v466, 0.0
        %471 = vadd.xlane.f32.xlu0 %v470
        %v472 = vpop.xlane.xlu0 %471
        %v473 = vrcp.pop 32.0
        %v474 = vmul.f32 %v472, %v473
        %v475 = vsub.f32 %v466, %v474
        %v476 = vmul.f32 %v475, %v475
        %v477 = vsel %vm469, %v476, 0.0
        %478 = vadd.xlane.f32.xlu0 %v477
        %v479 = vpop.xlane.xlu0 %478
        %v480 = vmul.f32 %v479, 0.032258064
        %v481 = vrsqrt.pop %v480
        %v482 = vmul.f32 %v480, %v481
        %vm483 = vcmp.eq.f32.partialorder %v480, inf
        %v484 = vsel %vm483, %v480, %v482
        %vm485 = vcmp.eq.f32.partialorder %v480, 0.0
        %v486 = vand.u32 %v480, 2147483648
        %v487 = vsel %vm485, %v486, %v484
        %v488 = vld [vmem:[%s8] sm:$0x1]
        %v490 = vlaneseq
        %v491 = vshrl.u32 %v490, 7
        %v492 = vsub.s32 0, %v491
        %v493 = vrot.slane %v488, %v492
        %v495 = vmul.f32 %v493, %v475
        %v496 = vadd.f32 %v487, 1e-06
        %v497 = vrcp.pop %v496
        %v498 = vmul.f32 %v495, %v497
        %v499 = vld [vmem:[%s9] sm:$0x1]
        %v501 = vlaneseq
        %v502 = vshrl.u32 %v501, 7
        %v503 = vsub.s32 0, %v502
        %v504 = vrot.slane %v499, %v503
        %v506 = vadd.f32 %v498, %v504
        %v507 = vld [vmem:[%s2] sm:$0xff]
        %v508 = vld [vmem:[%s2 + $0x8] sm:$0xff]
        %v509 = vld [vmem:[%s2 + $0x10] sm:$0xff]
        %v510 = vld [vmem:[%s2 + $0x18] sm:$0xff]
        %v512 = vsel %vm469, %v506, 0
        %514 = vmatprep.subr.mxu0 0.0
        %515 = vmatpush1.msra.mxu0 %v507
        %516 = vmatprep.subr.mxu0 0.0
        %517 = vmatpush1.msra.mxu0 %v508
        %518 = vmatprep.subr.mxu0 0.0
        %519 = vmatpush1.msra.mxu0 %v509
        %520 = vmatprep.subr.mxu0 0.0
        %521 = vmatpush1.msra.mxu0 %v510
        %522 = vmatprep.subr.mxu0 0.0
        %523 = vmatpush1.msra.mxu0 0.0
        %524 = vmatprep.subr.mxu0 0.0
        %525 = vmatpush1.msra.mxu0 0.0
        %526 = vmatprep.subr.mxu0 0.0
        %527 = vmatpush1.msra.mxu0 0.0
        %528 = vmatprep.subr.mxu0 0.0
        %529 = vmatpush1.msra.mxu0 0.0
        %530 = vmatprep.subr.mxu0 0.0
        %531 = vmatpush1.msra.mxu0 0.0
        %532 = vmatprep.subr.mxu0 0.0
        %533 = vmatpush1.msra.mxu0 0.0
        %534 = vmatprep.subr.mxu0 0.0
        %535 = vmatpush1.msra.mxu0 0.0
        %536 = vmatprep.subr.mxu0 0.0
        %537 = vmatpush1.msra.mxu0 0.0
        %538 = vmatprep.subr.mxu0 0.0
        %539 = vmatpush1.msra.mxu0 0.0
        %540 = vmatprep.subr.mxu0 0.0
        %541 = vmatpush1.msra.mxu0 0.0
        %542 = vmatprep.subr.mxu0 0.0
        %543 = vmatpush1.msra.mxu0 0.0
        %544 = vmatprep.subr.mxu0 0.0
        %545 = vmatpush1.msra.mxu0 0.0
        %546 = vmatprep.subr.mxu0 0.0
        %547 = vmatpush1.msra.mxu0 0.0
        %548 = vmatprep.subr.mxu0 0.0
        %549 = vmatpush1.msra.mxu0 0.0
        %550 = vmatprep.subr.mxu0 0.0
        %551 = vmatpush1.msra.mxu0 0.0
        %552 = vmatprep.subr.mxu0 0.0
        %553 = vmatpush1.msra.mxu0 0.0
        %554 = vmatprep.subr.mxu0 0.0
        %555 = vmatpush1.msra.mxu0 0.0
        %556 = vmatprep.subr.mxu0 0.0
        %557 = vmatpush1.msra.mxu0 0.0
        %558 = vmatprep.subr.mxu0 0.0
        %559 = vmatpush1.msra.mxu0 0.0
        %560 = vmatprep.subr.mxu0 0.0
        %561 = vmatpush1.msra.mxu0 0.0
        %562 = vmatprep.subr.mxu0 0.0
        %563 = vmatpush1.msra.mxu0 0.0
        %564 = vmatprep.subr.mxu0 0.0
        %565 = vmatpush1.msra.mxu0 0.0
        %566 = vmatprep.subr.mxu0 0.0
        %567 = vmatpush1.msra.mxu0 0.0
        %568 = vmatprep.subr.mxu0 0.0
        %569 = vmatpush1.msra.mxu0 0.0
        %570 = vmatprep.subr.mxu0 0.0
        %571 = vmatpush1.msra.mxu0 0.0
        %572 = vmatprep.subr.mxu0 0.0
        %573 = vmatpush1.msra.mxu0 0.0
        %574 = vmatprep.subr.mxu0 0.0
        %575 = vmatpush1.msra.mxu0 0.0
        %576 = vmatprep.subr.mxu0 0.0
        %577 = vmatpush1.msra.mxu0 0.0
        %578 = vmatprep.mubr.f32.mxu0 0.0
        %579 = vmatmul.mubr.f32.gmra.mrb[0].mxu0 %v512
        %v580 = vpop.f32.mrb[0].mxu0
        %v581 = vadd.f32 0.0, %v580
        %v582 = vpop.f32.mrb[0].mxu0
        %583 = vdwg.mxu0
        %585 = vrot.lane.b32.xlu0 %v581, 96
        %v586 = vpop.permute.xlu0 %585
        %vm587 = vcmask 64512
        %v588 = vsel %vm587, %v581, 0
        %v590 = vsel %vm587, %v586, 0
        %592 = vmatprep.subr.mxu0 0.0
        %593 = vmatpush1.xpose.msra.mxu0 %v590
        %594 = vmatprep.subr.mxu0 0.0
        %595 = vmatpush1.xpose.msra.mxu0 0.0
        %596 = vmatprep.subr.mxu0 0.0
        %597 = vmatpush1.xpose.msra.mxu0 0.0
        %598 = vmatprep.subr.mxu0 0.0
        %599 = vmatpush1.xpose.msra.mxu0 0.0
        %600 = vmatprep.subr.mxu0 0.0
        %601 = vmatpush1.xpose.msra.mxu0 0.0
        %602 = vmatprep.subr.mxu0 0.0
        %603 = vmatpush1.xpose.msra.mxu0 0.0
        %604 = vmatprep.subr.mxu0 0.0
        %605 = vmatpush1.xpose.msra.mxu0 0.0
        %606 = vmatprep.subr.mxu0 0.0
        %607 = vmatpush1.xpose.msra.mxu0 0.0
        %608 = vmatprep.subr.mxu0 0.0
        %609 = vmatpush1.xpose.msra.mxu0 0.0
        %610 = vmatprep.subr.mxu0 0.0
        %611 = vmatpush1.xpose.msra.mxu0 0.0
        %612 = vmatprep.subr.mxu0 0.0
        %613 = vmatpush1.xpose.msra.mxu0 0.0
        %614 = vmatprep.subr.mxu0 0.0
        %615 = vmatpush1.xpose.msra.mxu0 0.0
        %616 = vmatprep.subr.mxu0 0.0
        %617 = vmatpush1.xpose.msra.mxu0 0.0
        %618 = vmatprep.subr.mxu0 0.0
        %619 = vmatpush1.xpose.msra.mxu0 0.0
        %620 = vmatprep.subr.mxu0 0.0
        %621 = vmatpush1.xpose.msra.mxu0 0.0
        %622 = vmatprep.subr.mxu0 0.0
        %623 = vmatpush1.xpose.msra.mxu0 0.0
        %624 = vmatprep.subr.mxu0 0.0
        %625 = vmatpush1.xpose.msra.mxu0 0.0
        %626 = vmatprep.subr.mxu0 0.0
        %627 = vmatpush1.xpose.msra.mxu0 0.0
        %628 = vmatprep.subr.mxu0 0.0
        %629 = vmatpush1.xpose.msra.mxu0 0.0
        %630 = vmatprep.subr.mxu0 0.0
        %631 = vmatpush1.xpose.msra.mxu0 0.0
        %632 = vmatprep.subr.mxu0 0.0
        %633 = vmatpush1.xpose.msra.mxu0 0.0
        %634 = vmatprep.subr.mxu0 0.0
        %635 = vmatpush1.xpose.msra.mxu0 0.0
        %636 = vmatprep.subr.mxu0 0.0
        %637 = vmatpush1.xpose.msra.mxu0 0.0
        %638 = vmatprep.subr.mxu0 0.0
        %639 = vmatpush1.xpose.msra.mxu0 0.0
        %640 = vmatprep.subr.mxu0 0.0
        %641 = vmatpush1.xpose.msra.mxu0 0.0
        %642 = vmatprep.subr.mxu0 0.0
        %643 = vmatpush1.xpose.msra.mxu0 0.0
        %644 = vmatprep.subr.mxu0 0.0
        %645 = vmatpush1.xpose.msra.mxu0 0.0
        %646 = vmatprep.subr.mxu0 0.0
        %647 = vmatpush1.xpose.msra.mxu0 0.0
        %648 = vmatprep.subr.mxu0 0.0
        %649 = vmatpush1.xpose.msra.mxu0 0.0
        %650 = vmatprep.subr.mxu0 0.0
        %651 = vmatpush1.xpose.msra.mxu0 0.0
        %652 = vmatprep.subr.mxu0 0.0
        %653 = vmatpush1.xpose.msra.mxu0 0.0
        %654 = vmatprep.subr.mxu0 0.0
        %655 = vmatpush1.xpose.msra.mxu0 0.0
        %656 = vmatprep.mubr.f32.mxu0 0.0
        %657 = vmatmul.mubr.f32.gmra.mrb[0].mxu0 %v588
        %v658 = vpop.f32.mrb[0].mxu0
        %v659 = vadd.f32 0.0, %v658
        %v660 = vpop.f32.mrb[0].mxu0
        %661 = vdwg.mxu0
        %v662 = vmul.f32 %v659, 0.35355338
        %v663 = vsel %vm468, -1e+09, %v662
        %v664 = vsel %vm587, %v663, -inf
        %665 = vmax.xlane.f32.xlu0 %v664
        %v666 = vpop.xlane.xlu0 %665
        %v667 = vsub.f32 %v663, %v666
        %v668 = vmul.f32 %v667, 1.442695
        %v669 = vpow.pop %v668
        %v670 = vsel %vm587, %v669, 0.0
        %671 = vadd.xlane.f32.xlu0 %v670
        %v672 = vpop.xlane.xlu0 %671
        %v673 = vrcp.pop %v672
        %v674 = vmul.f32 %v669, %v673
        %675 = vrot.lane.b32.xlu0 %v581, 64
        %v676 = vpop.permute.xlu0 %675
        %v679 = vsel %vm587, %v674, 0
        %681 = vmatprep.subr.mxu0 0.0
        %682 = vmatpush1.msra.mxu0 %v676
        %683 = vmatprep.subr.mxu0 0.0
        %684 = vmatpush1.msra.mxu0 0.0
        %685 = vmatprep.subr.mxu0 0.0
        %686 = vmatpush1.msra.mxu0 0.0
        %687 = vmatprep.subr.mxu0 0.0
        %688 = vmatpush1.msra.mxu0 0.0
        %689 = vmatprep.subr.mxu0 0.0
        %690 = vmatpush1.msra.mxu0 0.0
        %691 = vmatprep.subr.mxu0 0.0
        %692 = vmatpush1.msra.mxu0 0.0
        %693 = vmatprep.subr.mxu0 0.0
        %694 = vmatpush1.msra.mxu0 0.0
        %695 = vmatprep.subr.mxu0 0.0
        %696 = vmatpush1.msra.mxu0 0.0
        %697 = vmatprep.subr.mxu0 0.0
        %698 = vmatpush1.msra.mxu0 0.0
        %699 = vmatprep.subr.mxu0 0.0
        %700 = vmatpush1.msra.mxu0 0.0
        %701 = vmatprep.subr.mxu0 0.0
        %702 = vmatpush1.msra.mxu0 0.0
        %703 = vmatprep.subr.mxu0 0.0
        %704 = vmatpush1.msra.mxu0 0.0
        %705 = vmatprep.subr.mxu0 0.0
        %706 = vmatpush1.msra.mxu0 0.0
        %707 = vmatprep.subr.mxu0 0.0
        %708 = vmatpush1.msra.mxu0 0.0
        %709 = vmatprep.subr.mxu0 0.0
        %710 = vmatpush1.msra.mxu0 0.0
        %711 = vmatprep.subr.mxu0 0.0
        %712 = vmatpush1.msra.mxu0 0.0
        %713 = vmatprep.subr.mxu0 0.0
        %714 = vmatpush1.msra.mxu0 0.0
        %715 = vmatprep.subr.mxu0 0.0
        %716 = vmatpush1.msra.mxu0 0.0
        %717 = vmatprep.subr.mxu0 0.0
        %718 = vmatpush1.msra.mxu0 0.0
        %719 = vmatprep.subr.mxu0 0.0
        %720 = vmatpush1.msra.mxu0 0.0
        %721 = vmatprep.subr.mxu0 0.0
        %722 = vmatpush1.msra.mxu0 0.0
        %723 = vmatprep.subr.mxu0 0.0
        %724 = vmatpush1.msra.mxu0 0.0
        %725 = vmatprep.subr.mxu0 0.0
        %726 = vmatpush1.msra.mxu0 0.0
        %727 = vmatprep.subr.mxu0 0.0
        %728 = vmatpush1.msra.mxu0 0.0
        %729 = vmatprep.subr.mxu0 0.0
        %730 = vmatpush1.msra.mxu0 0.0
        %731 = vmatprep.subr.mxu0 0.0
        %732 = vmatpush1.msra.mxu0 0.0
        %733 = vmatprep.subr.mxu0 0.0
        %734 = vmatpush1.msra.mxu0 0.0
        %735 = vmatprep.subr.mxu0 0.0
        %736 = vmatpush1.msra.mxu0 0.0
        %737 = vmatprep.subr.mxu0 0.0
        %738 = vmatpush1.msra.mxu0 0.0
        %739 = vmatprep.subr.mxu0 0.0
        %740 = vmatpush1.msra.mxu0 0.0
        %741 = vmatprep.subr.mxu0 0.0
        %742 = vmatpush1.msra.mxu0 0.0
        %743 = vmatprep.subr.mxu0 0.0
        %744 = vmatpush1.msra.mxu0 0.0
        %745 = vmatprep.mubr.f32.mxu0 0.0
        %746 = vmatmul.mubr.f32.gmra.mrb[0].mxu0 %v679
        %v747 = vpop.f32.mrb[0].mxu0
        %v748 = vadd.f32 0.0, %v747
        %v749 = vpop.f32.mrb[0].mxu0
        %750 = vdwg.mxu0
        %v751 = vld [vmem:[%s3] sm:$0xff]
        %752 = vrot.lane.b32.xlu0 %v581, 120
        %v753 = vpop.permute.xlu0 %752
        %754 = vrot.lane.b32.xlu0 %v581, 88
        %v755 = vpop.permute.xlu0 %754
        %v756 = vsel %vm587, %v753, 0
        %v758 = vsel %vm587, %v755, 0
        %760 = vmatprep.subr.mxu0 0.0
        %761 = vmatpush1.xpose.msra.mxu0 %v758
        %762 = vmatprep.subr.mxu0 0.0
        %763 = vmatpush1.xpose.msra.mxu0 0.0
        %764 = vmatprep.subr.mxu0 0.0
        %765 = vmatpush1.xpose.msra.mxu0 0.0
        %766 = vmatprep.subr.mxu0 0.0
        %767 = vmatpush1.xpose.msra.mxu0 0.0
        %768 = vmatprep.subr.mxu0 0.0
        %769 = vmatpush1.xpose.msra.mxu0 0.0
        %770 = vmatprep.subr.mxu0 0.0
        %771 = vmatpush1.xpose.msra.mxu0 0.0
        %772 = vmatprep.subr.mxu0 0.0
        %773 = vmatpush1.xpose.msra.mxu0 0.0
        %774 = vmatprep.subr.mxu0 0.0
        %775 = vmatpush1.xpose.msra.mxu0 0.0
        %776 = vmatprep.subr.mxu0 0.0
        %777 = vmatpush1.xpose.msra.mxu0 0.0
        %778 = vmatprep.subr.mxu0 0.0
        %779 = vmatpush1.xpose.msra.mxu0 0.0
        %780 = vmatprep.subr.mxu0 0.0
        %781 = vmatpush1.xpose.msra.mxu0 0.0
        %782 = vmatprep.subr.mxu0 0.0
        %783 = vmatpush1.xpose.msra.mxu0 0.0
        %784 = vmatprep.subr.mxu0 0.0
        %785 = vmatpush1.xpose.msra.mxu0 0.0
        %786 = vmatprep.subr.mxu0 0.0
        %787 = vmatpush1.xpose.msra.mxu0 0.0
        %788 = vmatprep.subr.mxu0 0.0
        %789 = vmatpush1.xpose.msra.mxu0 0.0
        %790 = vmatprep.subr.mxu0 0.0
        %791 = vmatpush1.xpose.msra.mxu0 0.0
        %792 = vmatprep.subr.mxu0 0.0
        %793 = vmatpush1.xpose.msra.mxu0 0.0
        %794 = vmatprep.subr.mxu0 0.0
        %795 = vmatpush1.xpose.msra.mxu0 0.0
        %796 = vmatprep.subr.mxu0 0.0
        %797 = vmatpush1.xpose.msra.mxu0 0.0
        %798 = vmatprep.subr.mxu0 0.0
        %799 = vmatpush1.xpose.msra.mxu0 0.0
        %800 = vmatprep.subr.mxu0 0.0
        %801 = vmatpush1.xpose.msra.mxu0 0.0
        %802 = vmatprep.subr.mxu0 0.0
        %803 = vmatpush1.xpose.msra.mxu0 0.0
        %804 = vmatprep.subr.mxu0 0.0
        %805 = vmatpush1.xpose.msra.mxu0 0.0
        %806 = vmatprep.subr.mxu0 0.0
        %807 = vmatpush1.xpose.msra.mxu0 0.0
        %808 = vmatprep.subr.mxu0 0.0
        %809 = vmatpush1.xpose.msra.mxu0 0.0
        %810 = vmatprep.subr.mxu0 0.0
        %811 = vmatpush1.xpose.msra.mxu0 0.0
        %812 = vmatprep.subr.mxu0 0.0
        %813 = vmatpush1.xpose.msra.mxu0 0.0
        %814 = vmatprep.subr.mxu0 0.0
        %815 = vmatpush1.xpose.msra.mxu0 0.0
        %816 = vmatprep.subr.mxu0 0.0
        %817 = vmatpush1.xpose.msra.mxu0 0.0
        %818 = vmatprep.subr.mxu0 0.0
        %819 = vmatpush1.xpose.msra.mxu0 0.0
        %820 = vmatprep.subr.mxu0 0.0
        %821 = vmatpush1.xpose.msra.mxu0 0.0
        %822 = vmatprep.subr.mxu0 0.0
        %823 = vmatpush1.xpose.msra.mxu0 0.0
        %824 = vmatprep.mubr.f32.mxu0 0.0
        %825 = vmatmul.mubr.f32.gmra.mrb[0].mxu0 %v756
        %v826 = vpop.f32.mrb[0].mxu0
        %v827 = vadd.f32 0.0, %v826
        %v828 = vpop.f32.mrb[0].mxu0
        %829 = vdwg.mxu0
        %v830 = vmul.f32 %v827, 0.35355338
        %v831 = vsel %vm468, -1e+09, %v830
        %v832 = vsel %vm587, %v831, -inf
        %833 = vmax.xlane.f32.xlu0 %v832
        %v834 = vpop.xlane.xlu0 %833
        %v835 = vsub.f32 %v831, %v834
        %v836 = vmul.f32 %v835, 1.442695
        %v837 = vpow.pop %v836
        %v838 = vsel %vm587, %v837, 0.0
        %839 = vadd.xlane.f32.xlu0 %v838
        %v840 = vpop.xlane.xlu0 %839
        %v841 = vrcp.pop %v840
        %v842 = vmul.f32 %v837, %v841
        %843 = vrot.lane.b32.xlu0 %v581, 56
        %v844 = vpop.permute.xlu0 %843
        %v847 = vsel %vm587, %v842, 0
        %849 = vmatprep.subr.mxu0 0.0
        %850 = vmatpush1.msra.mxu0 %v844
        %851 = vmatprep.subr.mxu0 0.0
        %852 = vmatpush1.msra.mxu0 0.0
        %853 = vmatprep.subr.mxu0 0.0
        %854 = vmatpush1.msra.mxu0 0.0
        %855 = vmatprep.subr.mxu0 0.0
        %856 = vmatpush1.msra.mxu0 0.0
        %857 = vmatprep.subr.mxu0 0.0
        %858 = vmatpush1.msra.mxu0 0.0
        %859 = vmatprep.subr.mxu0 0.0
        %860 = vmatpush1.msra.mxu0 0.0
        %861 = vmatprep.subr.mxu0 0.0
        %862 = vmatpush1.msra.mxu0 0.0
        %863 = vmatprep.subr.mxu0 0.0
        %864 = vmatpush1.msra.mxu0 0.0
        %865 = vmatprep.subr.mxu0 0.0
        %866 = vmatpush1.msra.mxu0 0.0
        %867 = vmatprep.subr.mxu0 0.0
        %868 = vmatpush1.msra.mxu0 0.0
        %869 = vmatprep.subr.mxu0 0.0
        %870 = vmatpush1.msra.mxu0 0.0
        %871 = vmatprep.subr.mxu0 0.0
        %872 = vmatpush1.msra.mxu0 0.0
        %873 = vmatprep.subr.mxu0 0.0
        %874 = vmatpush1.msra.mxu0 0.0
        %875 = vmatprep.subr.mxu0 0.0
        %876 = vmatpush1.msra.mxu0 0.0
        %877 = vmatprep.subr.mxu0 0.0
        %878 = vmatpush1.msra.mxu0 0.0
        %879 = vmatprep.subr.mxu0 0.0
        %880 = vmatpush1.msra.mxu0 0.0
        %881 = vmatprep.subr.mxu0 0.0
        %882 = vmatpush1.msra.mxu0 0.0
        %883 = vmatprep.subr.mxu0 0.0
        %884 = vmatpush1.msra.mxu0 0.0
        %885 = vmatprep.subr.mxu0 0.0
        %886 = vmatpush1.msra.mxu0 0.0
        %887 = vmatprep.subr.mxu0 0.0
        %888 = vmatpush1.msra.mxu0 0.0
        %889 = vmatprep.subr.mxu0 0.0
        %890 = vmatpush1.msra.mxu0 0.0
        %891 = vmatprep.subr.mxu0 0.0
        %892 = vmatpush1.msra.mxu0 0.0
        %893 = vmatprep.subr.mxu0 0.0
        %894 = vmatpush1.msra.mxu0 0.0
        %895 = vmatprep.subr.mxu0 0.0
        %896 = vmatpush1.msra.mxu0 0.0
        %897 = vmatprep.subr.mxu0 0.0
        %898 = vmatpush1.msra.mxu0 0.0
        %899 = vmatprep.subr.mxu0 0.0
        %900 = vmatpush1.msra.mxu0 0.0
        %901 = vmatprep.subr.mxu0 0.0
        %902 = vmatpush1.msra.mxu0 0.0
        %903 = vmatprep.subr.mxu0 0.0
        %904 = vmatpush1.msra.mxu0 0.0
        %905 = vmatprep.subr.mxu0 0.0
        %906 = vmatpush1.msra.mxu0 0.0
        %907 = vmatprep.subr.mxu0 0.0
        %908 = vmatpush1.msra.mxu0 0.0
        %909 = vmatprep.subr.mxu0 0.0
        %910 = vmatpush1.msra.mxu0 0.0
        %911 = vmatprep.subr.mxu0 0.0
        %912 = vmatpush1.msra.mxu0 0.0
        %913 = vmatprep.mubr.f32.mxu0 0.0
        %914 = vmatmul.mubr.f32.gmra.mrb[0].mxu0 %v847
        %v915 = vpop.f32.mrb[0].mxu0
        %v916 = vadd.f32 0.0, %v915
        %v917 = vpop.f32.mrb[0].mxu0
        %918 = vdwg.mxu0
        %v919 = vld [vmem:[%s3 + $0x8] sm:$0xff]
        %v921 = vsel %vm587, %v916, 0
        %923 = vmatprep.subr.mxu0 0.0
        %924 = vmatpush1.msra.mxu0 %v919
        %925 = vmatprep.subr.mxu0 0.0
        %926 = vmatpush1.msra.mxu0 0.0
        %927 = vmatprep.subr.mxu0 0.0
        %928 = vmatpush1.msra.mxu0 0.0
        %929 = vmatprep.subr.mxu0 0.0
        %930 = vmatpush1.msra.mxu0 0.0
        %931 = vmatprep.subr.mxu0 0.0
        %932 = vmatpush1.msra.mxu0 0.0
        %933 = vmatprep.subr.mxu0 0.0
        %934 = vmatpush1.msra.mxu0 0.0
        %935 = vmatprep.subr.mxu0 0.0
        %936 = vmatpush1.msra.mxu0 0.0
        %937 = vmatprep.subr.mxu0 0.0
        %938 = vmatpush1.msra.mxu0 0.0
        %939 = vmatprep.subr.mxu0 0.0
        %940 = vmatpush1.msra.mxu0 0.0
        %941 = vmatprep.subr.mxu0 0.0
        %942 = vmatpush1.msra.mxu0 0.0
        %943 = vmatprep.subr.mxu0 0.0
        %944 = vmatpush1.msra.mxu0 0.0
        %945 = vmatprep.subr.mxu0 0.0
        %946 = vmatpush1.msra.mxu0 0.0
        %947 = vmatprep.subr.mxu0 0.0
        %948 = vmatpush1.msra.mxu0 0.0
        %949 = vmatprep.subr.mxu0 0.0
        %950 = vmatpush1.msra.mxu0 0.0
        %951 = vmatprep.subr.mxu0 0.0
        %952 = vmatpush1.msra.mxu0 0.0
        %953 = vmatprep.subr.mxu0 0.0
        %954 = vmatpush1.msra.mxu0 0.0
        %955 = vmatprep.subr.mxu0 0.0
        %956 = vmatpush1.msra.mxu0 0.0
        %957 = vmatprep.subr.mxu0 0.0
        %958 = vmatpush1.msra.mxu0 0.0
        %959 = vmatprep.subr.mxu0 0.0
        %960 = vmatpush1.msra.mxu0 0.0
        %961 = vmatprep.subr.mxu0 0.0
        %962 = vmatpush1.msra.mxu0 0.0
        %963 = vmatprep.subr.mxu0 0.0
        %964 = vmatpush1.msra.mxu0 0.0
        %965 = vmatprep.subr.mxu0 0.0
        %966 = vmatpush1.msra.mxu0 0.0
        %967 = vmatprep.subr.mxu0 0.0
        %968 = vmatpush1.msra.mxu0 0.0
        %969 = vmatprep.subr.mxu0 0.0
        %970 = vmatpush1.msra.mxu0 0.0
        %971 = vmatprep.subr.mxu0 0.0
        %972 = vmatpush1.msra.mxu0 0.0
        %973 = vmatprep.subr.mxu0 0.0
        %974 = vmatpush1.msra.mxu0 0.0
        %975 = vmatprep.subr.mxu0 0.0
        %976 = vmatpush1.msra.mxu0 0.0
        %977 = vmatprep.subr.mxu0 0.0
        %978 = vmatpush1.msra.mxu0 0.0
        %979 = vmatprep.subr.mxu0 0.0
        %980 = vmatpush1.msra.mxu0 0.0
        %981 = vmatprep.subr.mxu0 0.0
        %982 = vmatpush1.msra.mxu0 0.0
        %983 = vmatprep.subr.mxu0 0.0
        %984 = vmatpush1.msra.mxu0 0.0
        %985 = vmatprep.subr.mxu0 0.0
        %986 = vmatpush1.msra.mxu0 0.0
        %987 = vmatprep.mubr.f32.mxu0 0.0
        %988 = vmatmul.mubr.f32.gmra.mrb[0].mxu0 %v921
        %v989 = vpop.f32.mrb[0].mxu0
        %v990 = vadd.f32 0.0, %v989
        %v991 = vpop.f32.mrb[0].mxu0
        %992 = vdwg.mxu0
        %v994 = vsel %vm587, %v748, 0
        %996 = vmatprep.subr.mxu0 0.0
        %997 = vmatpush1.msra.mxu0 %v751
        %998 = vmatprep.subr.mxu0 0.0
        %999 = vmatpush1.msra.mxu0 0.0
        %1000 = vmatprep.subr.mxu0 0.0
        %1001 = vmatpush1.msra.mxu0 0.0
        %1002 = vmatprep.subr.mxu0 0.0
        %1003 = vmatpush1.msra.mxu0 0.0
        %1004 = vmatprep.subr.mxu0 0.0
        %1005 = vmatpush1.msra.mxu0 0.0
        %1006 = vmatprep.subr.mxu0 0.0
        %1007 = vmatpush1.msra.mxu0 0.0
        %1008 = vmatprep.subr.mxu0 0.0
        %1009 = vmatpush1.msra.mxu0 0.0
        %1010 = vmatprep.subr.mxu0 0.0
        %1011 = vmatpush1.msra.mxu0 0.0
        %1012 = vmatprep.subr.mxu0 0.0
        %1013 = vmatpush1.msra.mxu0 0.0
        %1014 = vmatprep.subr.mxu0 0.0
        %1015 = vmatpush1.msra.mxu0 0.0
        %1016 = vmatprep.subr.mxu0 0.0
        %1017 = vmatpush1.msra.mxu0 0.0
        %1018 = vmatprep.subr.mxu0 0.0
        %1019 = vmatpush1.msra.mxu0 0.0
        %1020 = vmatprep.subr.mxu0 0.0
        %1021 = vmatpush1.msra.mxu0 0.0
        %1022 = vmatprep.subr.mxu0 0.0
        %1023 = vmatpush1.msra.mxu0 0.0
        %1024 = vmatprep.subr.mxu0 0.0
        %1025 = vmatpush1.msra.mxu0 0.0
        %1026 = vmatprep.subr.mxu0 0.0
        %1027 = vmatpush1.msra.mxu0 0.0
        %1028 = vmatprep.subr.mxu0 0.0
        %1029 = vmatpush1.msra.mxu0 0.0
        %1030 = vmatprep.subr.mxu0 0.0
        %1031 = vmatpush1.msra.mxu0 0.0
        %1032 = vmatprep.subr.mxu0 0.0
        %1033 = vmatpush1.msra.mxu0 0.0
        %1034 = vmatprep.subr.mxu0 0.0
        %1035 = vmatpush1.msra.mxu0 0.0
        %1036 = vmatprep.subr.mxu0 0.0
        %1037 = vmatpush1.msra.mxu0 0.0
        %1038 = vmatprep.subr.mxu0 0.0
        %1039 = vmatpush1.msra.mxu0 0.0
        %1040 = vmatprep.subr.mxu0 0.0
        %1041 = vmatpush1.msra.mxu0 0.0
        %1042 = vmatprep.subr.mxu0 0.0
        %1043 = vmatpush1.msra.mxu0 0.0
        %1044 = vmatprep.subr.mxu0 0.0
        %1045 = vmatpush1.msra.mxu0 0.0
        %1046 = vmatprep.subr.mxu0 0.0
        %1047 = vmatpush1.msra.mxu0 0.0
        %1048 = vmatprep.subr.mxu0 0.0
        %1049 = vmatpush1.msra.mxu0 0.0
        %1050 = vmatprep.subr.mxu0 0.0
        %1051 = vmatpush1.msra.mxu0 0.0
        %1052 = vmatprep.subr.mxu0 0.0
        %1053 = vmatpush1.msra.mxu0 0.0
        %1054 = vmatprep.subr.mxu0 0.0
        %1055 = vmatpush1.msra.mxu0 0.0
        %1056 = vmatprep.subr.mxu0 0.0
        %1057 = vmatpush1.msra.mxu0 0.0
        %1058 = vmatprep.subr.mxu0 0.0
        %1059 = vmatpush1.msra.mxu0 0.0
        %1060 = vmatprep.mubr.f32.mxu0 0.0
        %1061 = vmatmul.mubr.f32.gmra.mrb[0].mxu0 %v994
        %v1062 = vpop.f32.mrb[0].mxu0
        %v1063 = vadd.f32 %v990, %v1062
        %v1064 = vpop.f32.mrb[0].mxu0
        %1065 = vdwg.mxu0
        %1066 = vrot.lane.b32.xlu0 %v581, 112
        %v1067 = vpop.permute.xlu0 %1066
        %1068 = vrot.lane.b32.xlu0 %v581, 80
        %v1069 = vpop.permute.xlu0 %1068
        %v1070 = vsel %vm587, %v1067, 0
        %v1072 = vsel %vm587, %v1069, 0
        %1074 = vmatprep.subr.mxu0 0.0
        %1075 = vmatpush1.xpose.msra.mxu0 %v1072
        %1076 = vmatprep.subr.mxu0 0.0
        %1077 = vmatpush1.xpose.msra.mxu0 0.0
        %1078 = vmatprep.subr.mxu0 0.0
        %1079 = vmatpush1.xpose.msra.mxu0 0.0
        %1080 = vmatprep.subr.mxu0 0.0
        %1081 = vmatpush1.xpose.msra.mxu0 0.0
        %1082 = vmatprep.subr.mxu0 0.0
        %1083 = vmatpush1.xpose.msra.mxu0 0.0
        %1084 = vmatprep.subr.mxu0 0.0
        %1085 = vmatpush1.xpose.msra.mxu0 0.0
        %1086 = vmatprep.subr.mxu0 0.0
        %1087 = vmatpush1.xpose.msra.mxu0 0.0
        %1088 = vmatprep.subr.mxu0 0.0
        %1089 = vmatpush1.xpose.msra.mxu0 0.0
        %1090 = vmatprep.subr.mxu0 0.0
        %1091 = vmatpush1.xpose.msra.mxu0 0.0
        %1092 = vmatprep.subr.mxu0 0.0
        %1093 = vmatpush1.xpose.msra.mxu0 0.0
        %1094 = vmatprep.subr.mxu0 0.0
        %1095 = vmatpush1.xpose.msra.mxu0 0.0
        %1096 = vmatprep.subr.mxu0 0.0
        %1097 = vmatpush1.xpose.msra.mxu0 0.0
        %1098 = vmatprep.subr.mxu0 0.0
        %1099 = vmatpush1.xpose.msra.mxu0 0.0
        %1100 = vmatprep.subr.mxu0 0.0
        %1101 = vmatpush1.xpose.msra.mxu0 0.0
        %1102 = vmatprep.subr.mxu0 0.0
        %1103 = vmatpush1.xpose.msra.mxu0 0.0
        %1104 = vmatprep.subr.mxu0 0.0
        %1105 = vmatpush1.xpose.msra.mxu0 0.0
        %1106 = vmatprep.subr.mxu0 0.0
        %1107 = vmatpush1.xpose.msra.mxu0 0.0
        %1108 = vmatprep.subr.mxu0 0.0
        %1109 = vmatpush1.xpose.msra.mxu0 0.0
        %1110 = vmatprep.subr.mxu0 0.0
        %1111 = vmatpush1.xpose.msra.mxu0 0.0
        %1112 = vmatprep.subr.mxu0 0.0
        %1113 = vmatpush1.xpose.msra.mxu0 0.0
        %1114 = vmatprep.subr.mxu0 0.0
        %1115 = vmatpush1.xpose.msra.mxu0 0.0
        %1116 = vmatprep.subr.mxu0 0.0
        %1117 = vmatpush1.xpose.msra.mxu0 0.0
        %1118 = vmatprep.subr.mxu0 0.0
        %1119 = vmatpush1.xpose.msra.mxu0 0.0
        %1120 = vmatprep.subr.mxu0 0.0
        %1121 = vmatpush1.xpose.msra.mxu0 0.0
        %1122 = vmatprep.subr.mxu0 0.0
        %1123 = vmatpush1.xpose.msra.mxu0 0.0
        %1124 = vmatprep.subr.mxu0 0.0
        %1125 = vmatpush1.xpose.msra.mxu0 0.0
        %1126 = vmatprep.subr.mxu0 0.0
        %1127 = vmatpush1.xpose.msra.mxu0 0.0
        %1128 = vmatprep.subr.mxu0 0.0
        %1129 = vmatpush1.xpose.msra.mxu0 0.0
        %1130 = vmatprep.subr.mxu0 0.0
        %1131 = vmatpush1.xpose.msra.mxu0 0.0
        %1132 = vmatprep.subr.mxu0 0.0
        %1133 = vmatpush1.xpose.msra.mxu0 0.0
        %1134 = vmatprep.subr.mxu0 0.0
        %1135 = vmatpush1.xpose.msra.mxu0 0.0
        %1136 = vmatprep.subr.mxu0 0.0
        %1137 = vmatpush1.xpose.msra.mxu0 0.0
        %1138 = vmatprep.mubr.f32.mxu0 0.0
        %1139 = vmatmul.mubr.f32.gmra.mrb[0].mxu0 %v1070
        %v1140 = vpop.f32.mrb[0].mxu0
        %v1141 = vadd.f32 0.0, %v1140
        %v1142 = vpop.f32.mrb[0].mxu0
        %1143 = vdwg.mxu0
        %v1144 = vmul.f32 %v1141, 0.35355338
        %v1145 = vsel %vm468, -1e+09, %v1144
        %v1146 = vsel %vm587, %v1145, -inf
        %1147 = vmax.xlane.f32.xlu0 %v1146
        %v1148 = vpop.xlane.xlu0 %1147
        %v1149 = vsub.f32 %v1145, %v1148
        %v1150 = vmul.f32 %v1149, 1.442695
        %v1151 = vpow.pop %v1150
        %v1152 = vsel %vm587, %v1151, 0.0
        %1153 = vadd.xlane.f32.xlu0 %v1152
        %v1154 = vpop.xlane.xlu0 %1153
        %v1155 = vrcp.pop %v1154
        %v1156 = vmul.f32 %v1151, %v1155
        %1157 = vrot.lane.b32.xlu0 %v581, 48
        %v1158 = vpop.permute.xlu0 %1157
        %v1161 = vsel %vm587, %v1156, 0
        %1163 = vmatprep.subr.mxu0 0.0
        %1164 = vmatpush1.msra.mxu0 %v1158
        %1165 = vmatprep.subr.mxu0 0.0
        %1166 = vmatpush1.msra.mxu0 0.0
        %1167 = vmatprep.subr.mxu0 0.0
        %1168 = vmatpush1.msra.mxu0 0.0
        %1169 = vmatprep.subr.mxu0 0.0
        %1170 = vmatpush1.msra.mxu0 0.0
        %1171 = vmatprep.subr.mxu0 0.0
        %1172 = vmatpush1.msra.mxu0 0.0
        %1173 = vmatprep.subr.mxu0 0.0
        %1174 = vmatpush1.msra.mxu0 0.0
        %1175 = vmatprep.subr.mxu0 0.0
        %1176 = vmatpush1.msra.mxu0 0.0
        %1177 = vmatprep.subr.mxu0 0.0
        %1178 = vmatpush1.msra.mxu0 0.0
        %1179 = vmatprep.subr.mxu0 0.0
        %1180 = vmatpush1.msra.mxu0 0.0
        %1181 = vmatprep.subr.mxu0 0.0
        %1182 = vmatpush1.msra.mxu0 0.0
        %1183 = vmatprep.subr.mxu0 0.0
        %1184 = vmatpush1.msra.mxu0 0.0
        %1185 = vmatprep.subr.mxu0 0.0
        %1186 = vmatpush1.msra.mxu0 0.0
        %1187 = vmatprep.subr.mxu0 0.0
        %1188 = vmatpush1.msra.mxu0 0.0
        %1189 = vmatprep.subr.mxu0 0.0
        %1190 = vmatpush1.msra.mxu0 0.0
        %1191 = vmatprep.subr.mxu0 0.0
        %1192 = vmatpush1.msra.mxu0 0.0
        %1193 = vmatprep.subr.mxu0 0.0
        %1194 = vmatpush1.msra.mxu0 0.0
        %1195 = vmatprep.subr.mxu0 0.0
        %1196 = vmatpush1.msra.mxu0 0.0
        %1197 = vmatprep.subr.mxu0 0.0
        %1198 = vmatpush1.msra.mxu0 0.0
        %1199 = vmatprep.subr.mxu0 0.0
        %1200 = vmatpush1.msra.mxu0 0.0
        %1201 = vmatprep.subr.mxu0 0.0
        %1202 = vmatpush1.msra.mxu0 0.0
        %1203 = vmatprep.subr.mxu0 0.0
        %1204 = vmatpush1.msra.mxu0 0.0
        %1205 = vmatprep.subr.mxu0 0.0
        %1206 = vmatpush1.msra.mxu0 0.0
        %1207 = vmatprep.subr.mxu0 0.0
        %1208 = vmatpush1.msra.mxu0 0.0
        %1209 = vmatprep.subr.mxu0 0.0
        %1210 = vmatpush1.msra.mxu0 0.0
        %1211 = vmatprep.subr.mxu0 0.0
        %1212 = vmatpush1.msra.mxu0 0.0
        %1213 = vmatprep.subr.mxu0 0.0
        %1214 = vmatpush1.msra.mxu0 0.0
        %1215 = vmatprep.subr.mxu0 0.0
        %1216 = vmatpush1.msra.mxu0 0.0
        %1217 = vmatprep.subr.mxu0 0.0
        %1218 = vmatpush1.msra.mxu0 0.0
        %1219 = vmatprep.subr.mxu0 0.0
        %1220 = vmatpush1.msra.mxu0 0.0
        %1221 = vmatprep.subr.mxu0 0.0
        %1222 = vmatpush1.msra.mxu0 0.0
        %1223 = vmatprep.subr.mxu0 0.0
        %1224 = vmatpush1.msra.mxu0 0.0
        %1225 = vmatprep.subr.mxu0 0.0
        %1226 = vmatpush1.msra.mxu0 0.0
        %1227 = vmatprep.mubr.f32.mxu0 0.0
        %1228 = vmatmul.mubr.f32.gmra.mrb[0].mxu0 %v1161
        %v1229 = vpop.f32.mrb[0].mxu0
        %v1230 = vadd.f32 0.0, %v1229
        %v1231 = vpop.f32.mrb[0].mxu0
        %1232 = vdwg.mxu0
        %v1233 = vld [vmem:[%s3 + $0x10] sm:$0xff]
        %v1235 = vsel %vm587, %v1230, 0
        %1237 = vmatprep.subr.mxu0 0.0
        %1238 = vmatpush1.msra.mxu0 %v1233
        %1239 = vmatprep.subr.mxu0 0.0
        %1240 = vmatpush1.msra.mxu0 0.0
        %1241 = vmatprep.subr.mxu0 0.0
        %1242 = vmatpush1.msra.mxu0 0.0
        %1243 = vmatprep.subr.mxu0 0.0
        %1244 = vmatpush1.msra.mxu0 0.0
        %1245 = vmatprep.subr.mxu0 0.0
        %1246 = vmatpush1.msra.mxu0 0.0
        %1247 = vmatprep.subr.mxu0 0.0
        %1248 = vmatpush1.msra.mxu0 0.0
        %1249 = vmatprep.subr.mxu0 0.0
        %1250 = vmatpush1.msra.mxu0 0.0
        %1251 = vmatprep.subr.mxu0 0.0
        %1252 = vmatpush1.msra.mxu0 0.0
        %1253 = vmatprep.subr.mxu0 0.0
        %1254 = vmatpush1.msra.mxu0 0.0
        %1255 = vmatprep.subr.mxu0 0.0
        %1256 = vmatpush1.msra.mxu0 0.0
        %1257 = vmatprep.subr.mxu0 0.0
        %1258 = vmatpush1.msra.mxu0 0.0
        %1259 = vmatprep.subr.mxu0 0.0
        %1260 = vmatpush1.msra.mxu0 0.0
        %1261 = vmatprep.subr.mxu0 0.0
        %1262 = vmatpush1.msra.mxu0 0.0
        %1263 = vmatprep.subr.mxu0 0.0
        %1264 = vmatpush1.msra.mxu0 0.0
        %1265 = vmatprep.subr.mxu0 0.0
        %1266 = vmatpush1.msra.mxu0 0.0
        %1267 = vmatprep.subr.mxu0 0.0
        %1268 = vmatpush1.msra.mxu0 0.0
        %1269 = vmatprep.subr.mxu0 0.0
        %1270 = vmatpush1.msra.mxu0 0.0
        %1271 = vmatprep.subr.mxu0 0.0
        %1272 = vmatpush1.msra.mxu0 0.0
        %1273 = vmatprep.subr.mxu0 0.0
        %1274 = vmatpush1.msra.mxu0 0.0
        %1275 = vmatprep.subr.mxu0 0.0
        %1276 = vmatpush1.msra.mxu0 0.0
        %1277 = vmatprep.subr.mxu0 0.0
        %1278 = vmatpush1.msra.mxu0 0.0
        %1279 = vmatprep.subr.mxu0 0.0
        %1280 = vmatpush1.msra.mxu0 0.0
        %1281 = vmatprep.subr.mxu0 0.0
        %1282 = vmatpush1.msra.mxu0 0.0
        %1283 = vmatprep.subr.mxu0 0.0
        %1284 = vmatpush1.msra.mxu0 0.0
        %1285 = vmatprep.subr.mxu0 0.0
        %1286 = vmatpush1.msra.mxu0 0.0
        %1287 = vmatprep.subr.mxu0 0.0
        %1288 = vmatpush1.msra.mxu0 0.0
        %1289 = vmatprep.subr.mxu0 0.0
        %1290 = vmatpush1.msra.mxu0 0.0
        %1291 = vmatprep.subr.mxu0 0.0
        %1292 = vmatpush1.msra.mxu0 0.0
        %1293 = vmatprep.subr.mxu0 0.0
        %1294 = vmatpush1.msra.mxu0 0.0
        %1295 = vmatprep.subr.mxu0 0.0
        %1296 = vmatpush1.msra.mxu0 0.0
        %1297 = vmatprep.subr.mxu0 0.0
        %1298 = vmatpush1.msra.mxu0 0.0
        %1299 = vmatprep.subr.mxu0 0.0
        %1300 = vmatpush1.msra.mxu0 0.0
        %1301 = vmatprep.mubr.f32.mxu0 0.0
        %1302 = vmatmul.mubr.f32.gmra.mrb[0].mxu0 %v1235
        %v1303 = vpop.f32.mrb[0].mxu0
        %v1304 = vadd.f32 0.0, %v1303
        %v1305 = vpop.f32.mrb[0].mxu0
        %1306 = vdwg.mxu0
        %v1307 = vadd.f32 %v1063, %v1304
        %1308 = vrot.lane.b32.xlu0 %v581, 104
        %v1309 = vpop.permute.xlu0 %1308
        %1310 = vrot.lane.b32.xlu0 %v581, 72
        %v1311 = vpop.permute.xlu0 %1310
        %v1312 = vsel %vm587, %v1309, 0
        %v1314 = vsel %vm587, %v1311, 0
        %1316 = vmatprep.subr.mxu0 0.0
        %1317 = vmatpush1.xpose.msra.mxu0 %v1314
        %1318 = vmatprep.subr.mxu0 0.0
        %1319 = vmatpush1.xpose.msra.mxu0 0.0
        %1320 = vmatprep.subr.mxu0 0.0
        %1321 = vmatpush1.xpose.msra.mxu0 0.0
        %1322 = vmatprep.subr.mxu0 0.0
        %1323 = vmatpush1.xpose.msra.mxu0 0.0
        %1324 = vmatprep.subr.mxu0 0.0
        %1325 = vmatpush1.xpose.msra.mxu0 0.0
        %1326 = vmatprep.subr.mxu0 0.0
        %1327 = vmatpush1.xpose.msra.mxu0 0.0
        %1328 = vmatprep.subr.mxu0 0.0
        %1329 = vmatpush1.xpose.msra.mxu0 0.0
        %1330 = vmatprep.subr.mxu0 0.0
        %1331 = vmatpush1.xpose.msra.mxu0 0.0
        %1332 = vmatprep.subr.mxu0 0.0
        %1333 = vmatpush1.xpose.msra.mxu0 0.0
        %1334 = vmatprep.subr.mxu0 0.0
        %1335 = vmatpush1.xpose.msra.mxu0 0.0
        %1336 = vmatprep.subr.mxu0 0.0
        %1337 = vmatpush1.xpose.msra.mxu0 0.0
        %1338 = vmatprep.subr.mxu0 0.0
        %1339 = vmatpush1.xpose.msra.mxu0 0.0
        %1340 = vmatprep.subr.mxu0 0.0
        %1341 = vmatpush1.xpose.msra.mxu0 0.0
        %1342 = vmatprep.subr.mxu0 0.0
        %1343 = vmatpush1.xpose.msra.mxu0 0.0
        %1344 = vmatprep.subr.mxu0 0.0
        %1345 = vmatpush1.xpose.msra.mxu0 0.0
        %1346 = vmatprep.subr.mxu0 0.0
        %1347 = vmatpush1.xpose.msra.mxu0 0.0
        %1348 = vmatprep.subr.mxu0 0.0
        %1349 = vmatpush1.xpose.msra.mxu0 0.0
        %1350 = vmatprep.subr.mxu0 0.0
        %1351 = vmatpush1.xpose.msra.mxu0 0.0
        %1352 = vmatprep.subr.mxu0 0.0
        %1353 = vmatpush1.xpose.msra.mxu0 0.0
        %1354 = vmatprep.subr.mxu0 0.0
        %1355 = vmatpush1.xpose.msra.mxu0 0.0
        %1356 = vmatprep.subr.mxu0 0.0
        %1357 = vmatpush1.xpose.msra.mxu0 0.0
        %1358 = vmatprep.subr.mxu0 0.0
        %1359 = vmatpush1.xpose.msra.mxu0 0.0
        %1360 = vmatprep.subr.mxu0 0.0
        %1361 = vmatpush1.xpose.msra.mxu0 0.0
        %1362 = vmatprep.subr.mxu0 0.0
        %1363 = vmatpush1.xpose.msra.mxu0 0.0
        %1364 = vmatprep.subr.mxu0 0.0
        %1365 = vmatpush1.xpose.msra.mxu0 0.0
        %1366 = vmatprep.subr.mxu0 0.0
        %1367 = vmatpush1.xpose.msra.mxu0 0.0
        %1368 = vmatprep.subr.mxu0 0.0
        %1369 = vmatpush1.xpose.msra.mxu0 0.0
        %1370 = vmatprep.subr.mxu0 0.0
        %1371 = vmatpush1.xpose.msra.mxu0 0.0
        %1372 = vmatprep.subr.mxu0 0.0
        %1373 = vmatpush1.xpose.msra.mxu0 0.0
        %1374 = vmatprep.subr.mxu0 0.0
        %1375 = vmatpush1.xpose.msra.mxu0 0.0
        %1376 = vmatprep.subr.mxu0 0.0
        %1377 = vmatpush1.xpose.msra.mxu0 0.0
        %1378 = vmatprep.subr.mxu0 0.0
        %1379 = vmatpush1.xpose.msra.mxu0 0.0
        %1380 = vmatprep.mubr.f32.mxu0 0.0
        %1381 = vmatmul.mubr.f32.gmra.mrb[0].mxu0 %v1312
        %v1382 = vpop.f32.mrb[0].mxu0
        %v1383 = vadd.f32 0.0, %v1382
        %v1384 = vpop.f32.mrb[0].mxu0
        %1385 = vdwg.mxu0
        %v1386 = vmul.f32 %v1383, 0.35355338
        %v1387 = vsel %vm468, -1e+09, %v1386
        %v1388 = vsel %vm587, %v1387, -inf
        %1389 = vmax.xlane.f32.xlu0 %v1388
        %v1390 = vpop.xlane.xlu0 %1389
        %v1391 = vsub.f32 %v1387, %v1390
        %v1392 = vmul.f32 %v1391, 1.442695
        %v1393 = vpow.pop %v1392
        %v1394 = vsel %vm587, %v1393, 0.0
        %1395 = vadd.xlane.f32.xlu0 %v1394
        %v1396 = vpop.xlane.xlu0 %1395
        %v1397 = vrcp.pop %v1396
        %v1398 = vmul.f32 %v1393, %v1397
        %1399 = vrot.lane.b32.xlu0 %v581, 40
        %v1400 = vpop.permute.xlu0 %1399
        %v1403 = vsel %vm587, %v1398, 0
        %1405 = vmatprep.subr.mxu0 0.0
        %1406 = vmatpush1.msra.mxu0 %v1400
        %1407 = vmatprep.subr.mxu0 0.0
        %1408 = vmatpush1.msra.mxu0 0.0
        %1409 = vmatprep.subr.mxu0 0.0
        %1410 = vmatpush1.msra.mxu0 0.0
        %1411 = vmatprep.subr.mxu0 0.0
        %1412 = vmatpush1.msra.mxu0 0.0
        %1413 = vmatprep.subr.mxu0 0.0
        %1414 = vmatpush1.msra.mxu0 0.0
        %1415 = vmatprep.subr.mxu0 0.0
        %1416 = vmatpush1.msra.mxu0 0.0
        %1417 = vmatprep.subr.mxu0 0.0
        %1418 = vmatpush1.msra.mxu0 0.0
        %1419 = vmatprep.subr.mxu0 0.0
        %1420 = vmatpush1.msra.mxu0 0.0
        %1421 = vmatprep.subr.mxu0 0.0
        %1422 = vmatpush1.msra.mxu0 0.0
        %1423 = vmatprep.subr.mxu0 0.0
        %1424 = vmatpush1.msra.mxu0 0.0
        %1425 = vmatprep.subr.mxu0 0.0
        %1426 = vmatpush1.msra.mxu0 0.0
        %1427 = vmatprep.subr.mxu0 0.0
        %1428 = vmatpush1.msra.mxu0 0.0
        %1429 = vmatprep.subr.mxu0 0.0
        %1430 = vmatpush1.msra.mxu0 0.0
        %1431 = vmatprep.subr.mxu0 0.0
        %1432 = vmatpush1.msra.mxu0 0.0
        %1433 = vmatprep.subr.mxu0 0.0
        %1434 = vmatpush1.msra.mxu0 0.0
        %1435 = vmatprep.subr.mxu0 0.0
        %1436 = vmatpush1.msra.mxu0 0.0
        %1437 = vmatprep.subr.mxu0 0.0
        %1438 = vmatpush1.msra.mxu0 0.0
        %1439 = vmatprep.subr.mxu0 0.0
        %1440 = vmatpush1.msra.mxu0 0.0
        %1441 = vmatprep.subr.mxu0 0.0
        %1442 = vmatpush1.msra.mxu0 0.0
        %1443 = vmatprep.subr.mxu0 0.0
        %1444 = vmatpush1.msra.mxu0 0.0
        %1445 = vmatprep.subr.mxu0 0.0
        %1446 = vmatpush1.msra.mxu0 0.0
        %1447 = vmatprep.subr.mxu0 0.0
        %1448 = vmatpush1.msra.mxu0 0.0
        %1449 = vmatprep.subr.mxu0 0.0
        %1450 = vmatpush1.msra.mxu0 0.0
        %1451 = vmatprep.subr.mxu0 0.0
        %1452 = vmatpush1.msra.mxu0 0.0
        %1453 = vmatprep.subr.mxu0 0.0
        %1454 = vmatpush1.msra.mxu0 0.0
        %1455 = vmatprep.subr.mxu0 0.0
        %1456 = vmatpush1.msra.mxu0 0.0
        %1457 = vmatprep.subr.mxu0 0.0
        %1458 = vmatpush1.msra.mxu0 0.0
        %1459 = vmatprep.subr.mxu0 0.0
        %1460 = vmatpush1.msra.mxu0 0.0
        %1461 = vmatprep.subr.mxu0 0.0
        %1462 = vmatpush1.msra.mxu0 0.0
        %1463 = vmatprep.subr.mxu0 0.0
        %1464 = vmatpush1.msra.mxu0 0.0
        %1465 = vmatprep.subr.mxu0 0.0
        %1466 = vmatpush1.msra.mxu0 0.0
        %1467 = vmatprep.subr.mxu0 0.0
        %1468 = vmatpush1.msra.mxu0 0.0
        %1469 = vmatprep.mubr.f32.mxu0 0.0
        %1470 = vmatmul.mubr.f32.gmra.mrb[0].mxu0 %v1403
        %v1471 = vpop.f32.mrb[0].mxu0
        %v1472 = vadd.f32 0.0, %v1471
        %v1473 = vpop.f32.mrb[0].mxu0
        %1474 = vdwg.mxu0
        %v1475 = vld [vmem:[%s3 + $0x18] sm:$0xff]
        %v1477 = vsel %vm587, %v1472, 0
        %1479 = vmatprep.subr.mxu0 0.0
        %1480 = vmatpush1.msra.mxu0 %v1475
        %1481 = vmatprep.subr.mxu0 0.0
        %1482 = vmatpush1.msra.mxu0 0.0
        %1483 = vmatprep.subr.mxu0 0.0
        %1484 = vmatpush1.msra.mxu0 0.0
        %1485 = vmatprep.subr.mxu0 0.0
        %1486 = vmatpush1.msra.mxu0 0.0
        %1487 = vmatprep.subr.mxu0 0.0
        %1488 = vmatpush1.msra.mxu0 0.0
        %1489 = vmatprep.subr.mxu0 0.0
        %1490 = vmatpush1.msra.mxu0 0.0
        %1491 = vmatprep.subr.mxu0 0.0
        %1492 = vmatpush1.msra.mxu0 0.0
        %1493 = vmatprep.subr.mxu0 0.0
        %1494 = vmatpush1.msra.mxu0 0.0
        %1495 = vmatprep.subr.mxu0 0.0
        %1496 = vmatpush1.msra.mxu0 0.0
        %1497 = vmatprep.subr.mxu0 0.0
        %1498 = vmatpush1.msra.mxu0 0.0
        %1499 = vmatprep.subr.mxu0 0.0
        %1500 = vmatpush1.msra.mxu0 0.0
        %1501 = vmatprep.subr.mxu0 0.0
        %1502 = vmatpush1.msra.mxu0 0.0
        %1503 = vmatprep.subr.mxu0 0.0
        %1504 = vmatpush1.msra.mxu0 0.0
        %1505 = vmatprep.subr.mxu0 0.0
        %1506 = vmatpush1.msra.mxu0 0.0
        %1507 = vmatprep.subr.mxu0 0.0
        %1508 = vmatpush1.msra.mxu0 0.0
        %1509 = vmatprep.subr.mxu0 0.0
        %1510 = vmatpush1.msra.mxu0 0.0
        %1511 = vmatprep.subr.mxu0 0.0
        %1512 = vmatpush1.msra.mxu0 0.0
        %1513 = vmatprep.subr.mxu0 0.0
        %1514 = vmatpush1.msra.mxu0 0.0
        %1515 = vmatprep.subr.mxu0 0.0
        %1516 = vmatpush1.msra.mxu0 0.0
        %1517 = vmatprep.subr.mxu0 0.0
        %1518 = vmatpush1.msra.mxu0 0.0
        %1519 = vmatprep.subr.mxu0 0.0
        %1520 = vmatpush1.msra.mxu0 0.0
        %1521 = vmatprep.subr.mxu0 0.0
        %1522 = vmatpush1.msra.mxu0 0.0
        %1523 = vmatprep.subr.mxu0 0.0
        %1524 = vmatpush1.msra.mxu0 0.0
        %1525 = vmatprep.subr.mxu0 0.0
        %1526 = vmatpush1.msra.mxu0 0.0
        %1527 = vmatprep.subr.mxu0 0.0
        %1528 = vmatpush1.msra.mxu0 0.0
        %1529 = vmatprep.subr.mxu0 0.0
        %1530 = vmatpush1.msra.mxu0 0.0
        %1531 = vmatprep.subr.mxu0 0.0
        %1532 = vmatpush1.msra.mxu0 0.0
        %1533 = vmatprep.subr.mxu0 0.0
        %1534 = vmatpush1.msra.mxu0 0.0
        %1535 = vmatprep.subr.mxu0 0.0
        %1536 = vmatpush1.msra.mxu0 0.0
        %1537 = vmatprep.subr.mxu0 0.0
        %1538 = vmatpush1.msra.mxu0 0.0
        %1539 = vmatprep.subr.mxu0 0.0
        %1540 = vmatpush1.msra.mxu0 0.0
        %1541 = vmatprep.subr.mxu0 0.0
        %1542 = vmatpush1.msra.mxu0 0.0
        %1543 = vmatprep.mubr.f32.mxu0 0.0
        %1544 = vmatmul.mubr.f32.gmra.mrb[0].mxu0 %v1477
        %v1545 = vpop.f32.mrb[0].mxu0
        %v1546 = vadd.f32 0.0, %v1545
        %v1547 = vpop.f32.mrb[0].mxu0
        %1548 = vdwg.mxu0
        %v1549 = vadd.f32 %v1307, %v1546
        %v1550 = vadd.f32 %v466, %v1549
        %v1551 = vsel %vm469, %v1550, 0.0
        %1552 = vadd.xlane.f32.xlu0 %v1551
        %v1553 = vpop.xlane.xlu0 %1552
        %v1554 = vmul.f32 %v1553, %v473
        %v1555 = vsub.f32 %v1550, %v1554
        %v1556 = vmul.f32 %v1555, %v1555
        %v1557 = vsel %vm469, %v1556, 0.0
        %1558 = vadd.xlane.f32.xlu0 %v1557
        %v1559 = vpop.xlane.xlu0 %1558
        %v1560 = vmul.f32 %v1559, 0.032258064
        %v1561 = vrsqrt.pop %v1560
        %v1562 = vmul.f32 %v1560, %v1561
        %vm1563 = vcmp.eq.f32.partialorder %v1560, inf
        %v1564 = vsel %vm1563, %v1560, %v1562
        %vm1565 = vcmp.eq.f32.partialorder %v1560, 0.0
        %v1566 = vand.u32 %v1560, 2147483648
        %v1567 = vsel %vm1565, %v1566, %v1564
        %v1568 = vld [vmem:[%s10] sm:$0x1]
        %v1570 = vlaneseq
        %v1571 = vshrl.u32 %v1570, 7
        %v1572 = vsub.s32 0, %v1571
        %v1573 = vrot.slane %v1568, %v1572
        %v1575 = vmul.f32 %v1573, %v1555
        %v1576 = vadd.f32 %v1567, 1e-06
        %v1577 = vrcp.pop %v1576
        %v1578 = vmul.f32 %v1575, %v1577
        %v1579 = vld [vmem:[%s11] sm:$0x1]
        %v1581 = vlaneseq
        %v1582 = vshrl.u32 %v1581, 7
        %v1583 = vsub.s32 0, %v1582
        %v1584 = vrot.slane %v1579, %v1583
        %v1586 = vadd.f32 %v1578, %v1584
        %v1587 = vld [vmem:[%s4] sm:$0xff]
        %v1588 = vld [vmem:[%s4 + $0x8] sm:$0xff]
        %v1589 = vld [vmem:[%s4 + $0x10] sm:$0xff]
        %v1590 = vld [vmem:[%s4 + $0x18] sm:$0xff]
        %v1591 = vld [vmem:[%s5] sm:$0x1]
        %v1593 = vlaneseq
        %v1594 = vshrl.u32 %v1593, 7
        %v1595 = vsub.s32 0, %v1594
        %v1596 = vrot.slane %v1591, %v1595
        %v1599 = vsel %vm469, %v1586, 0
        %1601 = vmatprep.subr.mxu0 0.0
        %1602 = vmatpush1.msra.mxu0 %v1587
        %1603 = vmatprep.subr.mxu0 0.0
        %1604 = vmatpush1.msra.mxu0 %v1588
        %1605 = vmatprep.subr.mxu0 0.0
        %1606 = vmatpush1.msra.mxu0 %v1589
        %1607 = vmatprep.subr.mxu0 0.0
        %1608 = vmatpush1.msra.mxu0 %v1590
        %1609 = vmatprep.subr.mxu0 0.0
        %1610 = vmatpush1.msra.mxu0 0.0
        %1611 = vmatprep.subr.mxu0 0.0
        %1612 = vmatpush1.msra.mxu0 0.0
        %1613 = vmatprep.subr.mxu0 0.0
        %1614 = vmatpush1.msra.mxu0 0.0
        %1615 = vmatprep.subr.mxu0 0.0
        %1616 = vmatpush1.msra.mxu0 0.0
        %1617 = vmatprep.subr.mxu0 0.0
        %1618 = vmatpush1.msra.mxu0 0.0
        %1619 = vmatprep.subr.mxu0 0.0
        %1620 = vmatpush1.msra.mxu0 0.0
        %1621 = vmatprep.subr.mxu0 0.0
        %1622 = vmatpush1.msra.mxu0 0.0
        %1623 = vmatprep.subr.mxu0 0.0
        %1624 = vmatpush1.msra.mxu0 0.0
        %1625 = vmatprep.subr.mxu0 0.0
        %1626 = vmatpush1.msra.mxu0 0.0
        %1627 = vmatprep.subr.mxu0 0.0
        %1628 = vmatpush1.msra.mxu0 0.0
        %1629 = vmatprep.subr.mxu0 0.0
        %1630 = vmatpush1.msra.mxu0 0.0
        %1631 = vmatprep.subr.mxu0 0.0
        %1632 = vmatpush1.msra.mxu0 0.0
        %1633 = vmatprep.subr.mxu0 0.0
        %1634 = vmatpush1.msra.mxu0 0.0
        %1635 = vmatprep.subr.mxu0 0.0
        %1636 = vmatpush1.msra.mxu0 0.0
        %1637 = vmatprep.subr.mxu0 0.0
        %1638 = vmatpush1.msra.mxu0 0.0
        %1639 = vmatprep.subr.mxu0 0.0
        %1640 = vmatpush1.msra.mxu0 0.0
        %1641 = vmatprep.subr.mxu0 0.0
        %1642 = vmatpush1.msra.mxu0 0.0
        %1643 = vmatprep.subr.mxu0 0.0
        %1644 = vmatpush1.msra.mxu0 0.0
        %1645 = vmatprep.subr.mxu0 0.0
        %1646 = vmatpush1.msra.mxu0 0.0
        %1647 = vmatprep.subr.mxu0 0.0
        %1648 = vmatpush1.msra.mxu0 0.0
        %1649 = vmatprep.subr.mxu0 0.0
        %1650 = vmatpush1.msra.mxu0 0.0
        %1651 = vmatprep.subr.mxu0 0.0
        %1652 = vmatpush1.msra.mxu0 0.0
        %1653 = vmatprep.subr.mxu0 0.0
        %1654 = vmatpush1.msra.mxu0 0.0
        %1655 = vmatprep.subr.mxu0 0.0
        %1656 = vmatpush1.msra.mxu0 0.0
        %1657 = vmatprep.subr.mxu0 0.0
        %1658 = vmatpush1.msra.mxu0 0.0
        %1659 = vmatprep.subr.mxu0 0.0
        %1660 = vmatpush1.msra.mxu0 0.0
        %1661 = vmatprep.subr.mxu0 0.0
        %1662 = vmatpush1.msra.mxu0 0.0
        %1663 = vmatprep.subr.mxu0 0.0
        %1664 = vmatpush1.msra.mxu0 0.0
        %1665 = vmatprep.mubr.f32.mxu0 0.0
        %1666 = vmatmul.mubr.f32.gmra.mrb[0].mxu0 %v1599
        %v1667 = vpop.f32.mrb[0].mxu0
        %v1668 = vadd.f32 %v1596, %v1667
        %v1669 = vpop.f32.mrb[0].mxu0
        %1670 = vdwg.mxu0
        %v1671 = vmax.f32 %v1668, 0.0
        %v1672 = vld [vmem:[%s6] sm:$0xff]
        %v1673 = vld [vmem:[%s6 + $0x8] sm:$0xff]
        %v1674 = vld [vmem:[%s6 + $0x10] sm:$0xff]
        %v1675 = vld [vmem:[%s6 + $0x18] sm:$0xff]
        %v1676 = vld [vmem:[%s6 + $0x20] sm:$0xff]
        %v1677 = vld [vmem:[%s6 + $0x28] sm:$0xff]
        %v1678 = vld [vmem:[%s6 + $0x30] sm:$0xff]
        %v1679 = vld [vmem:[%s6 + $0x38] sm:$0xff]
        %v1680 = vld [vmem:[%s7] sm:$0x1]
        %v1682 = vlaneseq
        %v1683 = vshrl.u32 %v1682, 7
        %v1684 = vsub.s32 0, %v1683
        %v1685 = vrot.slane %v1680, %v1684
        %vm1687 = vcmask 523264
        %v1689 = vsel %vm1687, %v1671, 0
        %1691 = vmatprep.subr.mxu0 0.0
        %1692 = vmatpush1.msra.mxu0 %v1672
        %1693 = vmatprep.subr.mxu0 0.0
        %1694 = vmatpush1.msra.mxu0 %v1673
        %1695 = vmatprep.subr.mxu0 0.0
        %1696 = vmatpush1.msra.mxu0 %v1674
        %1697 = vmatprep.subr.mxu0 0.0
        %1698 = vmatpush1.msra.mxu0 %v1675
        %1699 = vmatprep.subr.mxu0 0.0
        %1700 = vmatpush1.msra.mxu0 %v1676
        %1701 = vmatprep.subr.mxu0 0.0
        %1702 = vmatpush1.msra.mxu0 %v1677
        %1703 = vmatprep.subr.mxu0 0.0
        %1704 = vmatpush1.msra.mxu0 %v1678
        %1705 = vmatprep.subr.mxu0 0.0
        %1706 = vmatpush1.msra.mxu0 %v1679
        %1707 = vmatprep.subr.mxu0 0.0
        %1708 = vmatpush1.msra.mxu0 0.0
        %1709 = vmatprep.subr.mxu0 0.0
        %1710 = vmatpush1.msra.mxu0 0.0
        %1711 = vmatprep.subr.mxu0 0.0
        %1712 = vmatpush1.msra.mxu0 0.0
        %1713 = vmatprep.subr.mxu0 0.0
        %1714 = vmatpush1.msra.mxu0 0.0
        %1715 = vmatprep.subr.mxu0 0.0
        %1716 = vmatpush1.msra.mxu0 0.0
        %1717 = vmatprep.subr.mxu0 0.0
        %1718 = vmatpush1.msra.mxu0 0.0
        %1719 = vmatprep.subr.mxu0 0.0
        %1720 = vmatpush1.msra.mxu0 0.0
        %1721 = vmatprep.subr.mxu0 0.0
        %1722 = vmatpush1.msra.mxu0 0.0
        %1723 = vmatprep.subr.mxu0 0.0
        %1724 = vmatpush1.msra.mxu0 0.0
        %1725 = vmatprep.subr.mxu0 0.0
        %1726 = vmatpush1.msra.mxu0 0.0
        %1727 = vmatprep.subr.mxu0 0.0
        %1728 = vmatpush1.msra.mxu0 0.0
        %1729 = vmatprep.subr.mxu0 0.0
        %1730 = vmatpush1.msra.mxu0 0.0
        %1731 = vmatprep.subr.mxu0 0.0
        %1732 = vmatpush1.msra.mxu0 0.0
        %1733 = vmatprep.subr.mxu0 0.0
        %1734 = vmatpush1.msra.mxu0 0.0
        %1735 = vmatprep.subr.mxu0 0.0
        %1736 = vmatpush1.msra.mxu0 0.0
        %1737 = vmatprep.subr.mxu0 0.0
        %1738 = vmatpush1.msra.mxu0 0.0
        %1739 = vmatprep.subr.mxu0 0.0
        %1740 = vmatpush1.msra.mxu0 0.0
        %1741 = vmatprep.subr.mxu0 0.0
        %1742 = vmatpush1.msra.mxu0 0.0
        %1743 = vmatprep.subr.mxu0 0.0
        %1744 = vmatpush1.msra.mxu0 0.0
        %1745 = vmatprep.subr.mxu0 0.0
        %1746 = vmatpush1.msra.mxu0 0.0
        %1747 = vmatprep.subr.mxu0 0.0
        %1748 = vmatpush1.msra.mxu0 0.0
        %1749 = vmatprep.subr.mxu0 0.0
        %1750 = vmatpush1.msra.mxu0 0.0
        %1751 = vmatprep.subr.mxu0 0.0
        %1752 = vmatpush1.msra.mxu0 0.0
        %1753 = vmatprep.subr.mxu0 0.0
        %1754 = vmatpush1.msra.mxu0 0.0
        %1755 = vmatprep.mubr.f32.mxu0 0.0
        %1756 = vmatmul.mubr.f32.gmra.mrb[0].mxu0 %v1689
        %v1757 = vpop.f32.mrb[0].mxu0
        %v1758 = vadd.f32 %v1685, %v1757
        %v1759 = vpop.f32.mrb[0].mxu0
        %1760 = vdwg.mxu0
        %v1761 = vadd.f32 %v1550, %v1758
        %1762 = vst.msk [vmem:[%s465] sm:$0xff] %vm469, %v1761
        %s1763 = sand.u32 %s302, 1
        %s1764 = scalar_lea.sflag [#allocation4], %s1763
        %s1765 = sand.u32 %s302, 1
        %s1766 = smul.addr %s1765, 8
        %s1767 = scalar_lea.vmem [#allocation7], %s1766
        // Predicated region
        $region77: #{tpu_custom_call.1} parent=67 // pred_check
          %p1768 = pneg %p312
        $region78: #{tpu_custom_call.1} parent=67 // pred_check_branch
          %1770 = sbr.rel (%p1768) target = $region80
        $region79: #{tpu_custom_call.1} parent=67 // pred_region
          %s1772 = ssub.s32 128, 128
          %1773 = vsyncadd %s1764, %s1772
          %s1774 = smul.addr %s32, 128
          %s1775 = scalar_lea.hbm %s12, %s1774
          %s1777 = sshll.u32 %s1767, 4
          %s1778 = int_to_ptr.vmem [resolvable:$true] %s1777
          %1780 = dma.vmem_to_hbm [thread:$0]  %s1778, 128, %s1775, %s1764
        $region80: #{tpu_custom_call.1} parent=67 // pred_fallthru
          _
      $region68: #{tpu_custom_call.1} parent=5 // pred_fallthru
        _
      %p1781 = scmp.le.s32.totalorder 2, %s27
      // Predicated region
      $region81: #{tpu_custom_call.1} parent=5 // pred_check
        %p1782 = pneg %p1781
      $region82: #{tpu_custom_call.1} parent=5 // pred_check_branch
        %1784 = sbr.rel (%p1782) target = $region84
      $region83: #{tpu_custom_call.1} parent=5 // pred_region
        %s1785 = ssub.s32 %s27, 2
        // Predicated region
        $region85: #{tpu_custom_call.1} parent=83 // pred_check
          %p1786 = pneg %p318
        $region86: #{tpu_custom_call.1} parent=83 // pred_check_branch
          %1788 = sbr.rel (%p1786) target = $region88
        $region87: #{tpu_custom_call.1} parent=83 // pred_region
          %s1789 = sand.u32 %s303, 1
          %s1790 = scalar_lea.sflag [#allocation4], %s1789
          %s1791 = sand.u32 %s303, 1
          %s1792 = smul.addr %s1791, 8
          %s1793 = scalar_lea.vmem [#allocation7], %s1792
          %1794 = dma.done %s1790, 128
        $region88: #{tpu_custom_call.1} parent=83 // pred_fallthru
          _
      $region84: #{tpu_custom_call.1} parent=5 // pred_fallthru
        _
    $region6: #{tpu_custom_call.1} parent=1 // loop_footer
      %s31 = sadd.s32 1, %s27
    $region7: #{tpu_custom_call.1} parent=1 // loop_footer_branch
      %26 = sbr.rel target = $region3
    $region8: #{tpu_custom_call.1} parent=1 // loop_exit
      _
    %1795 = vsyncpa [#allocation3], 1
    %s1796 = scalar_lea.sflag [#allocation3], 1
    %1797 = vsyncpa %s1796, 1
    %1798 = vsyncpa [#allocation6], 1
    %s1799 = scalar_lea.sflag [#allocation6], 1
    %1800 = vsyncpa %s1799, 1
    %1801 = vsyncpa [#allocation4], 1
    %s1802 = scalar_lea.sflag [#allocation4], 1
    %1803 = vsyncpa %s1802, 1

</llo_original>
